<compile_context>
chip_gen: v5e
topology: v5e:2x2
jax: 0.10.0
libtpu: 0.0.40
codegen_flags: <defaults>
</compile_context>

<pallas_src>
import functools

import jax
import jax.numpy as jnp
from jax.experimental import pallas as pl
from jax.experimental.pallas import tpu as pltpu


def _ocgtl_loss_kernel(z_ref, c_ref, o_ref, *, inv_temp):
    # z_ref: (K, D, TB)  -- batch on the 128-lane axis.
    # c_ref: (K, D, 1) shared center, or (K, D, TB) per-sample center.
    # o_ref: (1, TB) per-sample loss.
    z = z_ref[...].astype(jnp.float32)
    c = c_ref[...].astype(jnp.float32)
    K = z.shape[0]
    TB = z.shape[-1]

    # ||z - c||_2 over the feature dim (sublane axis)           -> (K, TB)
    diff = z - c                       # c broadcasts over the batch lanes
    z_norm = jnp.sqrt(jnp.sum(diff * diff, axis=1))

    # F.normalize(z, p=2, dim=-1) with eps = 1e-12 (PyTorch), via rsqrt (EUP):
    # z / max(||z||, 1e-12) == z * rsqrt(max(||z||^2, 1e-24)).
    sumsq = jnp.sum(z * z, axis=1, keepdims=True)               # (K, 1, TB)
    zn = z * jax.lax.rsqrt(jnp.maximum(sumsq, 1e-24))           # (K, D, TB)

    # Off-diagonal row sums of exp(<zn_k, zn_j> / temp) and the positive-pair
    # (j == 0) logits, accumulated one similarity column at a time on the VPU
    # (K = 8, D = 32 is far too small for the MXU).  The diagonal is masked
    # out inside the loop, so there is no exp(diag) subtraction and no
    # cancellation when temperature << 1.  Every intermediate here is (K, TB)
    # and lane-dense over the batch.
    k_iota = jax.lax.broadcasted_iota(jnp.int32, (K, TB), 0)
    row_sum = jnp.zeros((K, TB), jnp.float32)
    pos_logit = None
    for j in range(K):                                          # K small & static
        col_logit = jnp.sum(zn * zn[j:j + 1], axis=1) * inv_temp   # (K, TB)
        row_sum = row_sum + jnp.where(k_iota == j, 0.0, jnp.exp(col_logit))
        if j == 0:
            # log(pos_sim) is just the j == 0 logit -- no exp/log round trip.
            pos_logit = col_logit

    # loss_tensor[k] = z_norm[k] + log(sum_{j != k} exp) - log(pos), k = 1..K-1.
    loss_rows = z_norm + jnp.log(row_sum) - pos_logit           # (K, TB)
    loss_rows = jnp.where(k_iota == 0, 0.0, loss_rows)          # drop row k = 0
    o_ref[...] = jnp.sum(loss_rows, axis=0)[None, :]            # lane-dense (1, TB)


def ocgtl_loss(z, c, temperature=1.0, eval=False):
    """JAX/Pallas equivalent of OCGTL_loss.forward((z, c), eval).

    z: (B, K, D), float32 or bfloat16.  c: (K, D), (1, K, D) or (B, K, D).
    Returns (B,) float32.  `eval` is accepted for API parity; the PyTorch
    module returns the same loss_tensor.sum(1) in both modes.
    """
    z = jnp.asarray(z)
    if z.dtype != jnp.float32 and z.dtype != jnp.bfloat16:
        z = z.astype(jnp.float32)
    B, K, D = z.shape
    c = jnp.asarray(c, z.dtype)
    if c.ndim == 2:
        c = c[None]

    # Lane-axis batch tile: the whole batch when small, otherwise a multiple
    # of 128 capped at 1024 (block = K*D*TB*4 B <= 1 MiB for K*D = 256) while
    # targeting ~8 grid steps so v7x's two TensorCores both stay busy and the
    # ~0.35 us per-grid-step overhead is amortized.
    if B <= 128:
        TB = B
    else:
        TB = min(1024, 128 * pl.cdiv(B, 1024))
    nb = pl.cdiv(B, TB)

    # Batch-on-lanes layout: one XLA transpose in the wrapper (free if the
    # producer already emits z as (K, D, B)).
    z_t = jnp.transpose(z, (1, 2, 0))                      # (K, D, B)
    if c.shape[0] == 1:
        # Shared per-transformation center: one (K, D, 1) block, read once and
        # resident across the whole batch grid.
        c_t = jnp.transpose(c, (1, 2, 0))                  # (K, D, 1)
        c_spec = pl.BlockSpec((K, D, 1), lambda i: (0, 0, 0))
    else:
        c_t = jnp.transpose(jnp.broadcast_to(c, (B, K, D)), (1, 2, 0))
        c_spec = pl.BlockSpec((K, D, TB), lambda i: (0, 0, i))

    kernel = functools.partial(_ocgtl_loss_kernel,
                               inv_temp=float(1.0 / temperature))

    out = pl.pallas_call(
        kernel,
        out_shape=jax.ShapeDtypeStruct((1, B), jnp.float32),
        grid_spec=pltpu.PrefetchScalarGridSpec(
            num_scalar_prefetch=0,
            grid=(nb,),
            in_specs=[
                pl.BlockSpec((K, D, TB), lambda i: (0, 0, i)),
                c_spec,
            ],
            out_specs=pl.BlockSpec((1, TB), lambda i: (0, i)),
        ),
        compiler_params=pltpu.CompilerParams(
            dimension_semantics=("parallel",)),
    )(z_t, c_t)
    return out[0]


def _ocgtl_loss_ref(z, c, temperature=1.0):
    """Pure-JAX reference mirroring the PyTorch code, for verification."""
    z = jnp.asarray(z, jnp.float32)
    c = jnp.broadcast_to(jnp.asarray(c, jnp.float32), z.shape)
    z_norm = jnp.sqrt(jnp.sum((z - c) ** 2, axis=-1))
    zn = z / jnp.maximum(
        jnp.sqrt(jnp.sum(z * z, axis=-1, keepdims=True)), 1e-12)
    K = z.shape[1]
    sim = jnp.exp(jnp.einsum('bkd,bjd->bkj', zn, zn) / temperature)
    offdiag = ~jnp.eye(K, dtype=bool)
    row_sum = jnp.sum(jnp.where(offdiag[None], sim, 0.0), axis=-1)
    trans = row_sum[:, 1:]
    pos = jnp.exp(jnp.sum(zn[:, 1:] * zn[:, :1], axis=-1) / temperature)
    lt = z_norm[:, 1:] + jnp.log(trans) - jnp.log(pos)
    return lt.sum(1)


if __name__ == "__main__":
    key = jax.random.PRNGKey(0)
    B, K, D = 8, 8, 32          # batch, num_trans, z_dim
    kz, kc = jax.random.split(key)
    z = jax.random.normal(kz, (B, K, D), dtype=jnp.float32)
    # One center per transformation (as in OCGTL), shared across the batch.
    c = 0.1 * jax.random.normal(kc, (1, K, D), dtype=jnp.float32)

    out = ocgtl_loss(z, c, temperature=1.0)
    jax.block_until_ready(out)

    ref = _ocgtl_loss_ref(z, c, temperature=1.0)
    assert out.shape == (B,)
    assert jnp.allclose(out, ref, atol=1e-4, rtol=1e-4), (out, ref)
    print("KERNEL_OK")
</pallas_src>

<mosaic_0001>
module attributes {stable_mosaic.version = 11 : i64} {
  func.func @_ocgtl_loss_kernel(%arg0: i32, %arg1: memref<8x32x8xf32, #tpu.memory_space<vmem>>, %arg2: memref<8x32x1xf32, #tpu.memory_space<vmem>>, %arg3: memref<1x8xf32, #tpu.memory_space<vmem>>) attributes {dimension_semantics = [#tpu.dimension_semantics<parallel>], iteration_bounds = array<i64: 1>, scalar_prefetch = 0 : i64, scratch_operands = 0 : i64, tpu.core_type = #tpu.core_type<tc>, window_params = [{transform_indices = @transform_0, window_bounds = array<i64: 8, 32, 8>}, {pipeline_mode = #tpu.pipeline_mode<synchronous>, transform_indices = @transform_1, window_bounds = array<i64: 8, 32, 1>}, {transform_indices = @transform_2, window_bounds = array<i64: 1, 8>}]} {
    %c0 = arith.constant 0 : index
    %c0_0 = arith.constant 0 : index
    %c0_1 = arith.constant 0 : index
    %0 = vector.load %arg1[%c0, %c0_0, %c0_1] : memref<8x32x8xf32, #tpu.memory_space<vmem>>, vector<8x32x8xf32>
    %c0_2 = arith.constant 0 : index
    %c0_3 = arith.constant 0 : index
    %c0_4 = arith.constant 0 : index
    %1 = vector.load %arg2[%c0_2, %c0_3, %c0_4] : memref<8x32x1xf32, #tpu.memory_space<vmem>>, vector<8x32x1xf32>
    %2 = vector.broadcast %1 : vector<8x32x1xf32> to vector<8x32x8xf32>
    %3 = arith.subf %0, %2 : vector<8x32x8xf32>
    %4 = arith.mulf %3, %3 : vector<8x32x8xf32>
    %cst = arith.constant dense<0.000000e+00> : vector<8x8xf32>
    %5 = vector.multi_reduction <add>, %4, %cst [1] : vector<8x32x8xf32> to vector<8x8xf32>
    %6 = math.sqrt %5 : vector<8x8xf32>
    %7 = arith.mulf %0, %0 : vector<8x32x8xf32>
    %cst_5 = arith.constant dense<0.000000e+00> : vector<8x8xf32>
    %8 = vector.multi_reduction <add>, %7, %cst_5 [1] : vector<8x32x8xf32> to vector<8x8xf32>
    %9 = vector.shape_cast %8 : vector<8x8xf32> to vector<8x1x8xf32>
    %cst_6 = arith.constant 1.000000e-24 : f32
    %10 = vector.broadcast %cst_6 : f32 to vector<8x1x8xf32>
    %11 = arith.maximumf %9, %10 : vector<8x1x8xf32>
    %12 = math.rsqrt %11 : vector<8x1x8xf32>
    %13 = vector.broadcast %12 : vector<8x1x8xf32> to vector<8x32x8xf32>
    %14 = arith.mulf %0, %13 : vector<8x32x8xf32>
    %15 = tpu.iota {dimensions = array<i32: 0>} : vector<8x8xi32>
    %cst_7 = arith.constant 0.000000e+00 : f32
    %16 = vector.broadcast %cst_7 : f32 to vector<8x8xf32>
    %17 = vector.extract_strided_slice %14 {offsets = [0, 0, 0], sizes = [1, 32, 8], strides = [1, 1, 1]} : vector<8x32x8xf32> to vector<1x32x8xf32>
    %18 = vector.broadcast %17 : vector<1x32x8xf32> to vector<8x32x8xf32>
    %19 = arith.mulf %14, %18 : vector<8x32x8xf32>
    %cst_8 = arith.constant dense<0.000000e+00> : vector<8x8xf32>
    %20 = vector.multi_reduction <add>, %19, %cst_8 [1] : vector<8x32x8xf32> to vector<8x8xf32>
    %cst_9 = arith.constant 1.000000e+00 : f32
    %21 = vector.broadcast %cst_9 : f32 to vector<8x8xf32>
    %22 = arith.mulf %20, %21 : vector<8x8xf32>
    %c0_i32 = arith.constant 0 : i32
    %23 = vector.broadcast %c0_i32 : i32 to vector<8x8xi32>
    %24 = arith.cmpi eq, %15, %23 : vector<8x8xi32>
    %25 = math.exp %22 : vector<8x8xf32>
    %cst_10 = arith.constant 0.000000e+00 : f32
    %26 = vector.broadcast %cst_10 : f32 to vector<8x8xf32>
    %27 = arith.select %24, %26, %25 : vector<8x8xi1>, vector<8x8xf32>
    %28 = arith.addf %16, %27 : vector<8x8xf32>
    %29 = vector.extract_strided_slice %14 {offsets = [1, 0, 0], sizes = [1, 32, 8], strides = [1, 1, 1]} : vector<8x32x8xf32> to vector<1x32x8xf32>
    %30 = vector.broadcast %29 : vector<1x32x8xf32> to vector<8x32x8xf32>
    %31 = arith.mulf %14, %30 : vector<8x32x8xf32>
    %cst_11 = arith.constant dense<0.000000e+00> : vector<8x8xf32>
    %32 = vector.multi_reduction <add>, %31, %cst_11 [1] : vector<8x32x8xf32> to vector<8x8xf32>
    %cst_12 = arith.constant 1.000000e+00 : f32
    %33 = vector.broadcast %cst_12 : f32 to vector<8x8xf32>
    %34 = arith.mulf %32, %33 : vector<8x8xf32>
    %c1_i32 = arith.constant 1 : i32
    %35 = vector.broadcast %c1_i32 : i32 to vector<8x8xi32>
    %36 = arith.cmpi eq, %15, %35 : vector<8x8xi32>
    %37 = math.exp %34 : vector<8x8xf32>
    %cst_13 = arith.constant 0.000000e+00 : f32
    %38 = vector.broadcast %cst_13 : f32 to vector<8x8xf32>
    %39 = arith.select %36, %38, %37 : vector<8x8xi1>, vector<8x8xf32>
    %40 = arith.addf %28, %39 : vector<8x8xf32>
    %41 = vector.extract_strided_slice %14 {offsets = [2, 0, 0], sizes = [1, 32, 8], strides = [1, 1, 1]} : vector<8x32x8xf32> to vector<1x32x8xf32>
    %42 = vector.broadcast %41 : vector<1x32x8xf32> to vector<8x32x8xf32>
    %43 = arith.mulf %14, %42 : vector<8x32x8xf32>
    %cst_14 = arith.constant dense<0.000000e+00> : vector<8x8xf32>
    %44 = vector.multi_reduction <add>, %43, %cst_14 [1] : vector<8x32x8xf32> to vector<8x8xf32>
    %cst_15 = arith.constant 1.000000e+00 : f32
    %45 = vector.broadcast %cst_15 : f32 to vector<8x8xf32>
    %46 = arith.mulf %44, %45 : vector<8x8xf32>
    %c2_i32 = arith.constant 2 : i32
    %47 = vector.broadcast %c2_i32 : i32 to vector<8x8xi32>
    %48 = arith.cmpi eq, %15, %47 : vector<8x8xi32>
    %49 = math.exp %46 : vector<8x8xf32>
    %cst_16 = arith.constant 0.000000e+00 : f32
    %50 = vector.broadcast %cst_16 : f32 to vector<8x8xf32>
    %51 = arith.select %48, %50, %49 : vector<8x8xi1>, vector<8x8xf32>
    %52 = arith.addf %40, %51 : vector<8x8xf32>
    %53 = vector.extract_strided_slice %14 {offsets = [3, 0, 0], sizes = [1, 32, 8], strides = [1, 1, 1]} : vector<8x32x8xf32> to vector<1x32x8xf32>
    %54 = vector.broadcast %53 : vector<1x32x8xf32> to vector<8x32x8xf32>
    %55 = arith.mulf %14, %54 : vector<8x32x8xf32>
    %cst_17 = arith.constant dense<0.000000e+00> : vector<8x8xf32>
    %56 = vector.multi_reduction <add>, %55, %cst_17 [1] : vector<8x32x8xf32> to vector<8x8xf32>
    %cst_18 = arith.constant 1.000000e+00 : f32
    %57 = vector.broadcast %cst_18 : f32 to vector<8x8xf32>
    %58 = arith.mulf %56, %57 : vector<8x8xf32>
    %c3_i32 = arith.constant 3 : i32
    %59 = vector.broadcast %c3_i32 : i32 to vector<8x8xi32>
    %60 = arith.cmpi eq, %15, %59 : vector<8x8xi32>
    %61 = math.exp %58 : vector<8x8xf32>
    %cst_19 = arith.constant 0.000000e+00 : f32
    %62 = vector.broadcast %cst_19 : f32 to vector<8x8xf32>
    %63 = arith.select %60, %62, %61 : vector<8x8xi1>, vector<8x8xf32>
    %64 = arith.addf %52, %63 : vector<8x8xf32>
    %65 = vector.extract_strided_slice %14 {offsets = [4, 0, 0], sizes = [1, 32, 8], strides = [1, 1, 1]} : vector<8x32x8xf32> to vector<1x32x8xf32>
    %66 = vector.broadcast %65 : vector<1x32x8xf32> to vector<8x32x8xf32>
    %67 = arith.mulf %14, %66 : vector<8x32x8xf32>
    %cst_20 = arith.constant dense<0.000000e+00> : vector<8x8xf32>
    %68 = vector.multi_reduction <add>, %67, %cst_20 [1] : vector<8x32x8xf32> to vector<8x8xf32>
    %cst_21 = arith.constant 1.000000e+00 : f32
    %69 = vector.broadcast %cst_21 : f32 to vector<8x8xf32>
    %70 = arith.mulf %68, %69 : vector<8x8xf32>
    %c4_i32 = arith.constant 4 : i32
    %71 = vector.broadcast %c4_i32 : i32 to vector<8x8xi32>
    %72 = arith.cmpi eq, %15, %71 : vector<8x8xi32>
    %73 = math.exp %70 : vector<8x8xf32>
    %cst_22 = arith.constant 0.000000e+00 : f32
    %74 = vector.broadcast %cst_22 : f32 to vector<8x8xf32>
    %75 = arith.select %72, %74, %73 : vector<8x8xi1>, vector<8x8xf32>
    %76 = arith.addf %64, %75 : vector<8x8xf32>
    %77 = vector.extract_strided_slice %14 {offsets = [5, 0, 0], sizes = [1, 32, 8], strides = [1, 1, 1]} : vector<8x32x8xf32> to vector<1x32x8xf32>
    %78 = vector.broadcast %77 : vector<1x32x8xf32> to vector<8x32x8xf32>
    %79 = arith.mulf %14, %78 : vector<8x32x8xf32>
    %cst_23 = arith.constant dense<0.000000e+00> : vector<8x8xf32>
    %80 = vector.multi_reduction <add>, %79, %cst_23 [1] : vector<8x32x8xf32> to vector<8x8xf32>
    %cst_24 = arith.constant 1.000000e+00 : f32
    %81 = vector.broadcast %cst_24 : f32 to vector<8x8xf32>
    %82 = arith.mulf %80, %81 : vector<8x8xf32>
    %c5_i32 = arith.constant 5 : i32
    %83 = vector.broadcast %c5_i32 : i32 to vector<8x8xi32>
    %84 = arith.cmpi eq, %15, %83 : vector<8x8xi32>
    %85 = math.exp %82 : vector<8x8xf32>
    %cst_25 = arith.constant 0.000000e+00 : f32
    %86 = vector.broadcast %cst_25 : f32 to vector<8x8xf32>
    %87 = arith.select %84, %86, %85 : vector<8x8xi1>, vector<8x8xf32>
    %88 = arith.addf %76, %87 : vector<8x8xf32>
    %89 = vector.extract_strided_slice %14 {offsets = [6, 0, 0], sizes = [1, 32, 8], strides = [1, 1, 1]} : vector<8x32x8xf32> to vector<1x32x8xf32>
    %90 = vector.broadcast %89 : vector<1x32x8xf32> to vector<8x32x8xf32>
    %91 = arith.mulf %14, %90 : vector<8x32x8xf32>
    %cst_26 = arith.constant dense<0.000000e+00> : vector<8x8xf32>
    %92 = vector.multi_reduction <add>, %91, %cst_26 [1] : vector<8x32x8xf32> to vector<8x8xf32>
    %cst_27 = arith.constant 1.000000e+00 : f32
    %93 = vector.broadcast %cst_27 : f32 to vector<8x8xf32>
    %94 = arith.mulf %92, %93 : vector<8x8xf32>
    %c6_i32 = arith.constant 6 : i32
    %95 = vector.broadcast %c6_i32 : i32 to vector<8x8xi32>
    %96 = arith.cmpi eq, %15, %95 : vector<8x8xi32>
    %97 = math.exp %94 : vector<8x8xf32>
    %cst_28 = arith.constant 0.000000e+00 : f32
    %98 = vector.broadcast %cst_28 : f32 to vector<8x8xf32>
    %99 = arith.select %96, %98, %97 : vector<8x8xi1>, vector<8x8xf32>
    %100 = arith.addf %88, %99 : vector<8x8xf32>
    %101 = vector.extract_strided_slice %14 {offsets = [7, 0, 0], sizes = [1, 32, 8], strides = [1, 1, 1]} : vector<8x32x8xf32> to vector<1x32x8xf32>
    %102 = vector.broadcast %101 : vector<1x32x8xf32> to vector<8x32x8xf32>
    %103 = arith.mulf %14, %102 : vector<8x32x8xf32>
    %cst_29 = arith.constant dense<0.000000e+00> : vector<8x8xf32>
    %104 = vector.multi_reduction <add>, %103, %cst_29 [1] : vector<8x32x8xf32> to vector<8x8xf32>
    %cst_30 = arith.constant 1.000000e+00 : f32
    %105 = vector.broadcast %cst_30 : f32 to vector<8x8xf32>
    %106 = arith.mulf %104, %105 : vector<8x8xf32>
    %c7_i32 = arith.constant 7 : i32
    %107 = vector.broadcast %c7_i32 : i32 to vector<8x8xi32>
    %108 = arith.cmpi eq, %15, %107 : vector<8x8xi32>
    %109 = math.exp %106 : vector<8x8xf32>
    %cst_31 = arith.constant 0.000000e+00 : f32
    %110 = vector.broadcast %cst_31 : f32 to vector<8x8xf32>
    %111 = arith.select %108, %110, %109 : vector<8x8xi1>, vector<8x8xf32>
    %112 = arith.addf %100, %111 : vector<8x8xf32>
    %113 = math.log %112 : vector<8x8xf32>
    %114 = arith.addf %6, %113 : vector<8x8xf32>
    %115 = arith.subf %114, %22 : vector<8x8xf32>
    %c0_i32_32 = arith.constant 0 : i32
    %116 = vector.broadcast %c0_i32_32 : i32 to vector<8x8xi32>
    %117 = arith.cmpi eq, %15, %116 : vector<8x8xi32>
    %cst_33 = arith.constant 0.000000e+00 : f32
    %118 = vector.broadcast %cst_33 : f32 to vector<8x8xf32>
    %119 = arith.select %117, %118, %115 : vector<8x8xi1>, vector<8x8xf32>
    %cst_34 = arith.constant dense<0.000000e+00> : vector<8xf32>
    %120 = vector.multi_reduction <add>, %119, %cst_34 [0] : vector<8x8xf32> to vector<8xf32>
    %121 = vector.shape_cast %120 : vector<8xf32> to vector<1x8xf32>
    %c0_35 = arith.constant 0 : index
    %c0_36 = arith.constant 0 : index
    %122 = vector.load %arg3[%c0_35, %c0_36] : memref<1x8xf32, #tpu.memory_space<vmem>>, vector<1x8xf32>
    tpu.vector_store %arg3[%c0_35, %c0_36], %121 {strides = array<i32>} : memref<1x8xf32, #tpu.memory_space<vmem>>, vector<1x8xf32>,
    return
  }
  func.func @transform_0(%arg0: i32) -> (i32, i32, i32) {
    %c0_i32 = arith.constant 0 : i32
    %c0_i32_0 = arith.constant 0 : i32
    %c0_i32_1 = arith.constant 0 : i32
    return %c0_i32, %c0_i32_0, %arg0 : i32, i32, i32
  }
  func.func @transform_1(%arg0: i32) -> (i32, i32, i32) {
    %c0_i32 = arith.constant 0 : i32
    %c0_i32_0 = arith.constant 0 : i32
    %c0_i32_1 = arith.constant 0 : i32
    %c0_i32_2 = arith.constant 0 : i32
    return %c0_i32, %c0_i32_0, %c0_i32_1 : i32, i32, i32
  }
  func.func @transform_2(%arg0: i32) -> (i32, i32) {
    %c0_i32 = arith.constant 0 : i32
    %c0_i32_0 = arith.constant 0 : i32
    return %c0_i32, %arg0 : i32, i32
  }
}

</mosaic_0001>

<llo_original>
// kernel: tpu_custom_call.1
$region0: #{tpu_custom_call.1}
  #allocation0 [shape = 'u32[]', space=smem, size = 0x4, offset = 0x4, fixed_abs, tag = 'smem constant byte address 0x4 - core index']
  #allocation1 [shape = 'u32[72,128]{1,0:T(1,128)}', space=vmem, size = 0x9000, scoped, tag = 'internal scratch']
  %s0 = inlined_call_operand.vmem [shape: f32[8,32,8], index: 0, kind: input, shape index: {}]
  %s1 = inlined_call_operand.vmem [shape: f32[8,32,1], index: 1, kind: input, shape index: {}]
  %s2 = inlined_call_operand.hbm [shape: f32[1,8], index: 2, kind: output, shape index: {}]
  %s3 = sld [smem:[#allocation0]]
  $region18: #{tpu_custom_call.1} parent=0
    _
  %s5 = ssub.s32 1, %s3
  %s6 = scalar_select 0, %s5, %s3
  $region1: #{tpu_custom_call.1} parent=0
    #allocation2 [shape = 'u8[512]{0}', space=vmem, size = 0x400, scoped, tag = 'output window, operand 0, single buffered']
    #allocation3 [shape = 's32[1]{0}', space=sflag, size = 0x4, scoped, tag = 'scoped memory for tpu_custom_call.1']
    %7 = vsyncpa [#allocation3], 0
    // Predicated region
    $region2: #{tpu_custom_call.1} parent=1 // pred_check
      _
    $region3: #{tpu_custom_call.1} parent=1 // pred_check_branch
      %9 = sbr.rel (0) target = $region5
    $region4: #{tpu_custom_call.1} parent=1 // pred_region
      _
    $region5: #{tpu_custom_call.1} parent=1 // pred_fallthru
      _
    // Predicated region
    $region6: #{tpu_custom_call.1} parent=1 // pred_check
      _
    $region7: #{tpu_custom_call.1} parent=1 // pred_check_branch
      %11 = sbr.rel (0) target = $region9
    $region8: #{tpu_custom_call.1} parent=1 // pred_region
      _
    $region9: #{tpu_custom_call.1} parent=1 // pred_fallthru
      _
    %v12 = vld [vmem:[%s0] sm:$0xff]
    %v13 = vld [vmem:[%s0 + $0x8] sm:$0xff]
    %v14 = vld [vmem:[%s0 + $0x10] sm:$0xff]
    %v15 = vld [vmem:[%s0 + $0x18] sm:$0xff]
    %v16 = vld [vmem:[%s0 + $0x20] sm:$0xff]
    %v17 = vld [vmem:[%s0 + $0x28] sm:$0xff]
    %v18 = vld [vmem:[%s0 + $0x30] sm:$0xff]
    %v19 = vld [vmem:[%s0 + $0x38] sm:$0xff]
    %v20 = vld [vmem:[%s0 + $0x40] sm:$0xff]
    %v21 = vld [vmem:[%s0 + $0x48] sm:$0xff]
    %v22 = vld [vmem:[%s0 + $0x50] sm:$0xff]
    %v23 = vld [vmem:[%s0 + $0x58] sm:$0xff]
    %v24 = vld [vmem:[%s0 + $0x60] sm:$0xff]
    %v25 = vld [vmem:[%s0 + $0x68] sm:$0xff]
    %v26 = vld [vmem:[%s0 + $0x70] sm:$0xff]
    %v27 = vld [vmem:[%s0 + $0x78] sm:$0xff]
    %v28 = vld [vmem:[%s0 + $0x80] sm:$0xff]
    %v29 = vld [vmem:[%s0 + $0x88] sm:$0xff]
    %v30 = vld [vmem:[%s0 + $0x90] sm:$0xff]
    %v31 = vld [vmem:[%s0 + $0x98] sm:$0xff]
    %v32 = vld [vmem:[%s0 + $0xa0] sm:$0xff]
    %v33 = vld [vmem:[%s0 + $0xa8] sm:$0xff]
    %v34 = vld [vmem:[%s0 + $0xb0] sm:$0xff]
    %v35 = vld [vmem:[%s0 + $0xb8] sm:$0xff]
    %v36 = vld [vmem:[%s0 + $0xc0] sm:$0xff]
    %v37 = vld [vmem:[%s0 + $0xc8] sm:$0xff]
    %v38 = vld [vmem:[%s0 + $0xd0] sm:$0xff]
    %v39 = vld [vmem:[%s0 + $0xd8] sm:$0xff]
    %v40 = vld [vmem:[%s0 + $0xe0] sm:$0xff]
    %v41 = vld [vmem:[%s0 + $0xe8] sm:$0xff]
    %v42 = vld [vmem:[%s0 + $0xf0] sm:$0xff]
    %v43 = vld [vmem:[%s0 + $0xf8] sm:$0xff]
    %v44 = vld [vmem:[%s1] sm:$0xff]
    %v45 = vld [vmem:[%s1 + $0x8] sm:$0xff]
    %v46 = vld [vmem:[%s1 + $0x10] sm:$0xff]
    %v47 = vld [vmem:[%s1 + $0x18] sm:$0xff]
    %v48 = vld [vmem:[%s1 + $0x20] sm:$0xff]
    %v49 = vld [vmem:[%s1 + $0x28] sm:$0xff]
    %v50 = vld [vmem:[%s1 + $0x30] sm:$0xff]
    %v51 = vld [vmem:[%s1 + $0x38] sm:$0xff]
    %v52 = vld [vmem:[%s1 + $0x40] sm:$0xff]
    %v53 = vld [vmem:[%s1 + $0x48] sm:$0xff]
    %v54 = vld [vmem:[%s1 + $0x50] sm:$0xff]
    %v55 = vld [vmem:[%s1 + $0x58] sm:$0xff]
    %v56 = vld [vmem:[%s1 + $0x60] sm:$0xff]
    %v57 = vld [vmem:[%s1 + $0x68] sm:$0xff]
    %v58 = vld [vmem:[%s1 + $0x70] sm:$0xff]
    %v59 = vld [vmem:[%s1 + $0x78] sm:$0xff]
    %v60 = vld [vmem:[%s1 + $0x80] sm:$0xff]
    %v61 = vld [vmem:[%s1 + $0x88] sm:$0xff]
    %v62 = vld [vmem:[%s1 + $0x90] sm:$0xff]
    %v63 = vld [vmem:[%s1 + $0x98] sm:$0xff]
    %v64 = vld [vmem:[%s1 + $0xa0] sm:$0xff]
    %v65 = vld [vmem:[%s1 + $0xa8] sm:$0xff]
    %v66 = vld [vmem:[%s1 + $0xb0] sm:$0xff]
    %v67 = vld [vmem:[%s1 + $0xb8] sm:$0xff]
    %v68 = vld [vmem:[%s1 + $0xc0] sm:$0xff]
    %v69 = vld [vmem:[%s1 + $0xc8] sm:$0xff]
    %v70 = vld [vmem:[%s1 + $0xd0] sm:$0xff]
    %v71 = vld [vmem:[%s1 + $0xd8] sm:$0xff]
    %v72 = vld [vmem:[%s1 + $0xe0] sm:$0xff]
    %v73 = vld [vmem:[%s1 + $0xe8] sm:$0xff]
    %v74 = vld [vmem:[%s1 + $0xf0] sm:$0xff]
    %v75 = vld [vmem:[%s1 + $0xf8] sm:$0xff]
    %77 = vset.pattern.permute.xlu0 0
    %78 = vperm.xlu0 %77, %v44
    %v79 = vpop.permute.xlu0 %78
    %82 = vset.pattern.permute.xlu0 0
    %83 = vperm.xlu0 %82, %v45
    %v84 = vpop.permute.xlu0 %83
    %87 = vset.pattern.permute.xlu0 0
    %88 = vperm.xlu0 %87, %v46
    %v89 = vpop.permute.xlu0 %88
    %92 = vset.pattern.permute.xlu0 0
    %93 = vperm.xlu0 %92, %v47
    %v94 = vpop.permute.xlu0 %93
    %97 = vset.pattern.permute.xlu0 0
    %98 = vperm.xlu0 %97, %v48
    %v99 = vpop.permute.xlu0 %98
    %102 = vset.pattern.permute.xlu0 0
    %103 = vperm.xlu0 %102, %v49
    %v104 = vpop.permute.xlu0 %103
    %107 = vset.pattern.permute.xlu0 0
    %108 = vperm.xlu0 %107, %v50
    %v109 = vpop.permute.xlu0 %108
    %112 = vset.pattern.permute.xlu0 0
    %113 = vperm.xlu0 %112, %v51
    %v114 = vpop.permute.xlu0 %113
    %117 = vset.pattern.permute.xlu0 0
    %118 = vperm.xlu0 %117, %v52
    %v119 = vpop.permute.xlu0 %118
    %122 = vset.pattern.permute.xlu0 0
    %123 = vperm.xlu0 %122, %v53
    %v124 = vpop.permute.xlu0 %123
    %127 = vset.pattern.permute.xlu0 0
    %128 = vperm.xlu0 %127, %v54
    %v129 = vpop.permute.xlu0 %128
    %132 = vset.pattern.permute.xlu0 0
    %133 = vperm.xlu0 %132, %v55
    %v134 = vpop.permute.xlu0 %133
    %137 = vset.pattern.permute.xlu0 0
    %138 = vperm.xlu0 %137, %v56
    %v139 = vpop.permute.xlu0 %138
    %142 = vset.pattern.permute.xlu0 0
    %143 = vperm.xlu0 %142, %v57
    %v144 = vpop.permute.xlu0 %143
    %147 = vset.pattern.permute.xlu0 0
    %148 = vperm.xlu0 %147, %v58
    %v149 = vpop.permute.xlu0 %148
    %152 = vset.pattern.permute.xlu0 0
    %153 = vperm.xlu0 %152, %v59
    %v154 = vpop.permute.xlu0 %153
    %157 = vset.pattern.permute.xlu0 0
    %158 = vperm.xlu0 %157, %v60
    %v159 = vpop.permute.xlu0 %158
    %162 = vset.pattern.permute.xlu0 0
    %163 = vperm.xlu0 %162, %v61
    %v164 = vpop.permute.xlu0 %163
    %167 = vset.pattern.permute.xlu0 0
    %168 = vperm.xlu0 %167, %v62
    %v169 = vpop.permute.xlu0 %168
    %172 = vset.pattern.permute.xlu0 0
    %173 = vperm.xlu0 %172, %v63
    %v174 = vpop.permute.xlu0 %173
    %177 = vset.pattern.permute.xlu0 0
    %178 = vperm.xlu0 %177, %v64
    %v179 = vpop.permute.xlu0 %178
    %182 = vset.pattern.permute.xlu0 0
    %183 = vperm.xlu0 %182, %v65
    %v184 = vpop.permute.xlu0 %183
    %187 = vset.pattern.permute.xlu0 0
    %188 = vperm.xlu0 %187, %v66
    %v189 = vpop.permute.xlu0 %188
    %192 = vset.pattern.permute.xlu0 0
    %193 = vperm.xlu0 %192, %v67
    %v194 = vpop.permute.xlu0 %193
    %197 = vset.pattern.permute.xlu0 0
    %198 = vperm.xlu0 %197, %v68
    %v199 = vpop.permute.xlu0 %198
    %202 = vset.pattern.permute.xlu0 0
    %203 = vperm.xlu0 %202, %v69
    %v204 = vpop.permute.xlu0 %203
    %207 = vset.pattern.permute.xlu0 0
    %208 = vperm.xlu0 %207, %v70
    %v209 = vpop.permute.xlu0 %208
    %212 = vset.pattern.permute.xlu0 0
    %213 = vperm.xlu0 %212, %v71
    %v214 = vpop.permute.xlu0 %213
    %217 = vset.pattern.permute.xlu0 0
    %218 = vperm.xlu0 %217, %v72
    %v219 = vpop.permute.xlu0 %218
    %222 = vset.pattern.permute.xlu0 0
    %223 = vperm.xlu0 %222, %v73
    %v224 = vpop.permute.xlu0 %223
    %227 = vset.pattern.permute.xlu0 0
    %228 = vperm.xlu0 %227, %v74
    %v229 = vpop.permute.xlu0 %228
    %232 = vset.pattern.permute.xlu0 0
    %233 = vperm.xlu0 %232, %v75
    %v234 = vpop.permute.xlu0 %233
    %v236 = vsub.f32 %v12, %v79
    %v237 = vsub.f32 %v13, %v84
    %v238 = vsub.f32 %v14, %v89
    %v239 = vsub.f32 %v15, %v94
    %v240 = vsub.f32 %v16, %v99
    %v241 = vsub.f32 %v17, %v104
    %v242 = vsub.f32 %v18, %v109
    %v243 = vsub.f32 %v19, %v114
    %v244 = vsub.f32 %v20, %v119
    %v245 = vsub.f32 %v21, %v124
    %v246 = vsub.f32 %v22, %v129
    %v247 = vsub.f32 %v23, %v134
    %v248 = vsub.f32 %v24, %v139
    %v249 = vsub.f32 %v25, %v144
    %v250 = vsub.f32 %v26, %v149
    %v251 = vsub.f32 %v27, %v154
    %v252 = vsub.f32 %v28, %v159
    %v253 = vsub.f32 %v29, %v164
    %v254 = vsub.f32 %v30, %v169
    %v255 = vsub.f32 %v31, %v174
    %v256 = vsub.f32 %v32, %v179
    %v257 = vsub.f32 %v33, %v184
    %v258 = vsub.f32 %v34, %v189
    %v259 = vsub.f32 %v35, %v194
    %v260 = vsub.f32 %v36, %v199
    %v261 = vsub.f32 %v37, %v204
    %v262 = vsub.f32 %v38, %v209
    %v263 = vsub.f32 %v39, %v214
    %v264 = vsub.f32 %v40, %v219
    %v265 = vsub.f32 %v41, %v224
    %v266 = vsub.f32 %v42, %v229
    %v267 = vsub.f32 %v43, %v234
    %v268 = vmul.f32 %v236, %v236
    %v269 = vmul.f32 %v237, %v237
    %v270 = vmul.f32 %v238, %v238
    %v271 = vmul.f32 %v239, %v239
    %v272 = vmul.f32 %v240, %v240
    %v273 = vmul.f32 %v241, %v241
    %v274 = vmul.f32 %v242, %v242
    %v275 = vmul.f32 %v243, %v243
    %v276 = vmul.f32 %v244, %v244
    %v277 = vmul.f32 %v245, %v245
    %v278 = vmul.f32 %v246, %v246
    %v279 = vmul.f32 %v247, %v247
    %v280 = vmul.f32 %v248, %v248
    %v281 = vmul.f32 %v249, %v249
    %v282 = vmul.f32 %v250, %v250
    %v283 = vmul.f32 %v251, %v251
    %v284 = vmul.f32 %v252, %v252
    %v285 = vmul.f32 %v253, %v253
    %v286 = vmul.f32 %v254, %v254
    %v287 = vmul.f32 %v255, %v255
    %v288 = vmul.f32 %v256, %v256
    %v289 = vmul.f32 %v257, %v257
    %v290 = vmul.f32 %v258, %v258
    %v291 = vmul.f32 %v259, %v259
    %v292 = vmul.f32 %v260, %v260
    %v293 = vmul.f32 %v261, %v261
    %v294 = vmul.f32 %v262, %v262
    %v295 = vmul.f32 %v263, %v263
    %v296 = vmul.f32 %v264, %v264
    %v297 = vmul.f32 %v265, %v265
    %v298 = vmul.f32 %v266, %v266
    %v299 = vmul.f32 %v267, %v267
    %vm300 = vcmask 64512
    %v301 = vsel %vm300, %v268, 0.0
    %v302 = vsel %vm300, %v269, 0.0
    %v303 = vadd.f32 %v301, %v302
    %v304 = vsel %vm300, %v270, 0.0
    %v305 = vadd.f32 %v303, %v304
    %v306 = vsel %vm300, %v271, 0.0
    %v307 = vadd.f32 %v305, %v306
    %v308 = vrot.slane %v307, 4
    %v309 = vadd.f32 %v307, %v308
    %v310 = vrot.slane %v309, 2
    %v311 = vadd.f32 %v309, %v310
    %v312 = vrot.slane %v311, 1
    %v313 = vadd.f32 %v311, %v312
    %v314 = vsel %vm300, %v272, 0.0
    %v315 = vsel %vm300, %v273, 0.0
    %v316 = vadd.f32 %v314, %v315
    %v317 = vsel %vm300, %v274, 0.0
    %v318 = vadd.f32 %v316, %v317
    %v319 = vsel %vm300, %v275, 0.0
    %v320 = vadd.f32 %v318, %v319
    %v321 = vrot.slane %v320, 4
    %v322 = vadd.f32 %v320, %v321
    %v323 = vrot.slane %v322, 2
    %v324 = vadd.f32 %v322, %v323
    %v325 = vrot.slane %v324, 1
    %v326 = vadd.f32 %v324, %v325
    %v327 = vsel %vm300, %v276, 0.0
    %v328 = vsel %vm300, %v277, 0.0
    %v329 = vadd.f32 %v327, %v328
    %v330 = vsel %vm300, %v278, 0.0
    %v331 = vadd.f32 %v329, %v330
    %v332 = vsel %vm300, %v279, 0.0
    %v333 = vadd.f32 %v331, %v332
    %v334 = vrot.slane %v333, 4
    %v335 = vadd.f32 %v333, %v334
    %v336 = vrot.slane %v335, 2
    %v337 = vadd.f32 %v335, %v336
    %v338 = vrot.slane %v337, 1
    %v339 = vadd.f32 %v337, %v338
    %v340 = vsel %vm300, %v280, 0.0
    %v341 = vsel %vm300, %v281, 0.0
    %v342 = vadd.f32 %v340, %v341
    %v343 = vsel %vm300, %v282, 0.0
    %v344 = vadd.f32 %v342, %v343
    %v345 = vsel %vm300, %v283, 0.0
    %v346 = vadd.f32 %v344, %v345
    %v347 = vrot.slane %v346, 4
    %v348 = vadd.f32 %v346, %v347
    %v349 = vrot.slane %v348, 2
    %v350 = vadd.f32 %v348, %v349
    %v351 = vrot.slane %v350, 1
    %v352 = vadd.f32 %v350, %v351
    %v353 = vsel %vm300, %v284, 0.0
    %v354 = vsel %vm300, %v285, 0.0
    %v355 = vadd.f32 %v353, %v354
    %v356 = vsel %vm300, %v286, 0.0
    %v357 = vadd.f32 %v355, %v356
    %v358 = vsel %vm300, %v287, 0.0
    %v359 = vadd.f32 %v357, %v358
    %v360 = vrot.slane %v359, 4
    %v361 = vadd.f32 %v359, %v360
    %v362 = vrot.slane %v361, 2
    %v363 = vadd.f32 %v361, %v362
    %v364 = vrot.slane %v363, 1
    %v365 = vadd.f32 %v363, %v364
    %v366 = vsel %vm300, %v288, 0.0
    %v367 = vsel %vm300, %v289, 0.0
    %v368 = vadd.f32 %v366, %v367
    %v369 = vsel %vm300, %v290, 0.0
    %v370 = vadd.f32 %v368, %v369
    %v371 = vsel %vm300, %v291, 0.0
    %v372 = vadd.f32 %v370, %v371
    %v373 = vrot.slane %v372, 4
    %v374 = vadd.f32 %v372, %v373
    %v375 = vrot.slane %v374, 2
    %v376 = vadd.f32 %v374, %v375
    %v377 = vrot.slane %v376, 1
    %v378 = vadd.f32 %v376, %v377
    %v379 = vsel %vm300, %v292, 0.0
    %v380 = vsel %vm300, %v293, 0.0
    %v381 = vadd.f32 %v379, %v380
    %v382 = vsel %vm300, %v294, 0.0
    %v383 = vadd.f32 %v381, %v382
    %v384 = vsel %vm300, %v295, 0.0
    %v385 = vadd.f32 %v383, %v384
    %v386 = vrot.slane %v385, 4
    %v387 = vadd.f32 %v385, %v386
    %v388 = vrot.slane %v387, 2
    %v389 = vadd.f32 %v387, %v388
    %v390 = vrot.slane %v389, 1
    %v391 = vadd.f32 %v389, %v390
    %v392 = vsel %vm300, %v296, 0.0
    %v393 = vsel %vm300, %v297, 0.0
    %v394 = vadd.f32 %v392, %v393
    %v395 = vsel %vm300, %v298, 0.0
    %v396 = vadd.f32 %v394, %v395
    %v397 = vsel %vm300, %v299, 0.0
    %v398 = vadd.f32 %v396, %v397
    %v399 = vrot.slane %v398, 4
    %v400 = vadd.f32 %v398, %v399
    %v401 = vrot.slane %v400, 2
    %v402 = vadd.f32 %v400, %v401
    %v403 = vrot.slane %v402, 1
    %v404 = vadd.f32 %v402, %v403
    %v405 = vrsqrt.pop %v313
    %v406 = vmul.f32 %v405, %v313
    %v407 = vmul.f32 %v406, %v405
    %v408 = vmul.f32 0.5, %v407
    %v409 = vsub.f32 1.5, %v408
    %v410 = vmul.f32 %v405, %v409
    %v411 = vmul.f32 %v313, %v410
    %vm412 = vcmp.eq.f32.partialorder %v313, inf
    %v413 = vsel %vm412, %v313, %v411
    %vm414 = vcmp.eq.f32.partialorder %v313, 0.0
    %v415 = vand.u32 %v313, 2147483648
    %v416 = vsel %vm414, %v415, %v413
    %v417 = vrsqrt.pop %v326
    %v418 = vmul.f32 %v417, %v326
    %v419 = vmul.f32 %v418, %v417
    %v420 = vmul.f32 0.5, %v419
    %v421 = vsub.f32 1.5, %v420
    %v422 = vmul.f32 %v417, %v421
    %v423 = vmul.f32 %v326, %v422
    %vm424 = vcmp.eq.f32.partialorder %v326, inf
    %v425 = vsel %vm424, %v326, %v423
    %vm426 = vcmp.eq.f32.partialorder %v326, 0.0
    %v427 = vand.u32 %v326, 2147483648
    %v428 = vsel %vm426, %v427, %v425
    %v429 = vrsqrt.pop %v339
    %v430 = vmul.f32 %v429, %v339
    %v431 = vmul.f32 %v430, %v429
    %v432 = vmul.f32 0.5, %v431
    %v433 = vsub.f32 1.5, %v432
    %v434 = vmul.f32 %v429, %v433
    %v435 = vmul.f32 %v339, %v434
    %vm436 = vcmp.eq.f32.partialorder %v339, inf
    %v437 = vsel %vm436, %v339, %v435
    %vm438 = vcmp.eq.f32.partialorder %v339, 0.0
    %v439 = vand.u32 %v339, 2147483648
    %v440 = vsel %vm438, %v439, %v437
    %v441 = vrsqrt.pop %v352
    %v442 = vmul.f32 %v441, %v352
    %v443 = vmul.f32 %v442, %v441
    %v444 = vmul.f32 0.5, %v443
    %v445 = vsub.f32 1.5, %v444
    %v446 = vmul.f32 %v441, %v445
    %v447 = vmul.f32 %v352, %v446
    %vm448 = vcmp.eq.f32.partialorder %v352, inf
    %v449 = vsel %vm448, %v352, %v447
    %vm450 = vcmp.eq.f32.partialorder %v352, 0.0
    %v451 = vand.u32 %v352, 2147483648
    %v452 = vsel %vm450, %v451, %v449
    %v453 = vrsqrt.pop %v365
    %v454 = vmul.f32 %v453, %v365
    %v455 = vmul.f32 %v454, %v453
    %v456 = vmul.f32 0.5, %v455
    %v457 = vsub.f32 1.5, %v456
    %v458 = vmul.f32 %v453, %v457
    %v459 = vmul.f32 %v365, %v458
    %vm460 = vcmp.eq.f32.partialorder %v365, inf
    %v461 = vsel %vm460, %v365, %v459
    %vm462 = vcmp.eq.f32.partialorder %v365, 0.0
    %v463 = vand.u32 %v365, 2147483648
    %v464 = vsel %vm462, %v463, %v461
    %v465 = vrsqrt.pop %v378
    %v466 = vmul.f32 %v465, %v378
    %v467 = vmul.f32 %v466, %v465
    %v468 = vmul.f32 0.5, %v467
    %v469 = vsub.f32 1.5, %v468
    %v470 = vmul.f32 %v465, %v469
    %v471 = vmul.f32 %v378, %v470
    %vm472 = vcmp.eq.f32.partialorder %v378, inf
    %v473 = vsel %vm472, %v378, %v471
    %vm474 = vcmp.eq.f32.partialorder %v378, 0.0
    %v475 = vand.u32 %v378, 2147483648
    %v476 = vsel %vm474, %v475, %v473
    %v477 = vrsqrt.pop %v391
    %v478 = vmul.f32 %v477, %v391
    %v479 = vmul.f32 %v478, %v477
    %v480 = vmul.f32 0.5, %v479
    %v481 = vsub.f32 1.5, %v480
    %v482 = vmul.f32 %v477, %v481
    %v483 = vmul.f32 %v391, %v482
    %vm484 = vcmp.eq.f32.partialorder %v391, inf
    %v485 = vsel %vm484, %v391, %v483
    %vm486 = vcmp.eq.f32.partialorder %v391, 0.0
    %v487 = vand.u32 %v391, 2147483648
    %v488 = vsel %vm486, %v487, %v485
    %v489 = vrsqrt.pop %v404
    %v490 = vmul.f32 %v489, %v404
    %v491 = vmul.f32 %v490, %v489
    %v492 = vmul.f32 0.5, %v491
    %v493 = vsub.f32 1.5, %v492
    %v494 = vmul.f32 %v489, %v493
    %v495 = vmul.f32 %v404, %v494
    %vm496 = vcmp.eq.f32.partialorder %v404, inf
    %v497 = vsel %vm496, %v404, %v495
    %vm498 = vcmp.eq.f32.partialorder %v404, 0.0
    %v499 = vand.u32 %v404, 2147483648
    %v500 = vsel %vm498, %v499, %v497
    %v501 = vmul.f32 %v12, %v12
    %v502 = vmul.f32 %v13, %v13
    %v503 = vmul.f32 %v14, %v14
    %v504 = vmul.f32 %v15, %v15
    %v505 = vmul.f32 %v16, %v16
    %v506 = vmul.f32 %v17, %v17
    %v507 = vmul.f32 %v18, %v18
    %v508 = vmul.f32 %v19, %v19
    %v509 = vmul.f32 %v20, %v20
    %v510 = vmul.f32 %v21, %v21
    %v511 = vmul.f32 %v22, %v22
    %v512 = vmul.f32 %v23, %v23
    %v513 = vmul.f32 %v24, %v24
    %v514 = vmul.f32 %v25, %v25
    %v515 = vmul.f32 %v26, %v26
    %v516 = vmul.f32 %v27, %v27
    %v517 = vmul.f32 %v28, %v28
    %v518 = vmul.f32 %v29, %v29
    %v519 = vmul.f32 %v30, %v30
    %v520 = vmul.f32 %v31, %v31
    %v521 = vmul.f32 %v32, %v32
    %v522 = vmul.f32 %v33, %v33
    %v523 = vmul.f32 %v34, %v34
    %v524 = vmul.f32 %v35, %v35
    %v525 = vmul.f32 %v36, %v36
    %v526 = vmul.f32 %v37, %v37
    %v527 = vmul.f32 %v38, %v38
    %v528 = vmul.f32 %v39, %v39
    %v529 = vmul.f32 %v40, %v40
    %v530 = vmul.f32 %v41, %v41
    %v531 = vmul.f32 %v42, %v42
    %v532 = vmul.f32 %v43, %v43
    %v533 = vsel %vm300, %v501, 0.0
    %v534 = vsel %vm300, %v502, 0.0
    %v535 = vadd.f32 %v533, %v534
    %v536 = vsel %vm300, %v503, 0.0
    %v537 = vadd.f32 %v535, %v536
    %v538 = vsel %vm300, %v504, 0.0
    %v539 = vadd.f32 %v537, %v538
    %v540 = vrot.slane %v539, 4
    %v541 = vadd.f32 %v539, %v540
    %v542 = vrot.slane %v541, 2
    %v543 = vadd.f32 %v541, %v542
    %v544 = vrot.slane %v543, 1
    %v545 = vadd.f32 %v543, %v544
    %v546 = vsel %vm300, %v505, 0.0
    %v547 = vsel %vm300, %v506, 0.0
    %v548 = vadd.f32 %v546, %v547
    %v549 = vsel %vm300, %v507, 0.0
    %v550 = vadd.f32 %v548, %v549
    %v551 = vsel %vm300, %v508, 0.0
    %v552 = vadd.f32 %v550, %v551
    %v553 = vrot.slane %v552, 4
    %v554 = vadd.f32 %v552, %v553
    %v555 = vrot.slane %v554, 2
    %v556 = vadd.f32 %v554, %v555
    %v557 = vrot.slane %v556, 1
    %v558 = vadd.f32 %v556, %v557
    %v559 = vsel %vm300, %v509, 0.0
    %v560 = vsel %vm300, %v510, 0.0
    %v561 = vadd.f32 %v559, %v560
    %v562 = vsel %vm300, %v511, 0.0
    %v563 = vadd.f32 %v561, %v562
    %v564 = vsel %vm300, %v512, 0.0
    %v565 = vadd.f32 %v563, %v564
    %v566 = vrot.slane %v565, 4
    %v567 = vadd.f32 %v565, %v566
    %v568 = vrot.slane %v567, 2
    %v569 = vadd.f32 %v567, %v568
    %v570 = vrot.slane %v569, 1
    %v571 = vadd.f32 %v569, %v570
    %v572 = vsel %vm300, %v513, 0.0
    %v573 = vsel %vm300, %v514, 0.0
    %v574 = vadd.f32 %v572, %v573
    %v575 = vsel %vm300, %v515, 0.0
    %v576 = vadd.f32 %v574, %v575
    %v577 = vsel %vm300, %v516, 0.0
    %v578 = vadd.f32 %v576, %v577
    %v579 = vrot.slane %v578, 4
    %v580 = vadd.f32 %v578, %v579
    %v581 = vrot.slane %v580, 2
    %v582 = vadd.f32 %v580, %v581
    %v583 = vrot.slane %v582, 1
    %v584 = vadd.f32 %v582, %v583
    %v585 = vsel %vm300, %v517, 0.0
    %v586 = vsel %vm300, %v518, 0.0
    %v587 = vadd.f32 %v585, %v586
    %v588 = vsel %vm300, %v519, 0.0
    %v589 = vadd.f32 %v587, %v588
    %v590 = vsel %vm300, %v520, 0.0
    %v591 = vadd.f32 %v589, %v590
    %v592 = vrot.slane %v591, 4
    %v593 = vadd.f32 %v591, %v592
    %v594 = vrot.slane %v593, 2
    %v595 = vadd.f32 %v593, %v594
    %v596 = vrot.slane %v595, 1
    %v597 = vadd.f32 %v595, %v596
    %v598 = vsel %vm300, %v521, 0.0
    %v599 = vsel %vm300, %v522, 0.0
    %v600 = vadd.f32 %v598, %v599
    %v601 = vsel %vm300, %v523, 0.0
    %v602 = vadd.f32 %v600, %v601
    %v603 = vsel %vm300, %v524, 0.0
    %v604 = vadd.f32 %v602, %v603
    %v605 = vrot.slane %v604, 4
    %v606 = vadd.f32 %v604, %v605
    %v607 = vrot.slane %v606, 2
    %v608 = vadd.f32 %v606, %v607
    %v609 = vrot.slane %v608, 1
    %v610 = vadd.f32 %v608, %v609
    %v611 = vsel %vm300, %v525, 0.0
    %v612 = vsel %vm300, %v526, 0.0
    %v613 = vadd.f32 %v611, %v612
    %v614 = vsel %vm300, %v527, 0.0
    %v615 = vadd.f32 %v613, %v614
    %v616 = vsel %vm300, %v528, 0.0
    %v617 = vadd.f32 %v615, %v616
    %v618 = vrot.slane %v617, 4
    %v619 = vadd.f32 %v617, %v618
    %v620 = vrot.slane %v619, 2
    %v621 = vadd.f32 %v619, %v620
    %v622 = vrot.slane %v621, 1
    %v623 = vadd.f32 %v621, %v622
    %v624 = vsel %vm300, %v529, 0.0
    %v625 = vsel %vm300, %v530, 0.0
    %v626 = vadd.f32 %v624, %v625
    %v627 = vsel %vm300, %v531, 0.0
    %v628 = vadd.f32 %v626, %v627
    %v629 = vsel %vm300, %v532, 0.0
    %v630 = vadd.f32 %v628, %v629
    %v631 = vrot.slane %v630, 4
    %v632 = vadd.f32 %v630, %v631
    %v633 = vrot.slane %v632, 2
    %v634 = vadd.f32 %v632, %v633
    %v635 = vrot.slane %v634, 1
    %v636 = vadd.f32 %v634, %v635
    %v637 = vmax.f32 %v545, 1e-24
    %v638 = vmax.f32 %v558, 1e-24
    %v639 = vmax.f32 %v571, 1e-24
    %v640 = vmax.f32 %v584, 1e-24
    %v641 = vmax.f32 %v597, 1e-24
    %v642 = vmax.f32 %v610, 1e-24
    %v643 = vmax.f32 %v623, 1e-24
    %v644 = vmax.f32 %v636, 1e-24
    %v645 = vrsqrt.pop %v637
    %v646 = vmul.f32 %v645, %v637
    %v647 = vmul.f32 %v646, %v645
    %v648 = vmul.f32 0.5, %v647
    %v649 = vsub.f32 1.5, %v648
    %v650 = vmul.f32 %v645, %v649
    %vm651 = vweird.f32 %v637
    %vm652 = vweird.f32 %v645
    %vm653 = vmor %vm651, %vm652
    %v654 = vsel %vm653, %v645, %v650
    %v655 = vrsqrt.pop %v638
    %v656 = vmul.f32 %v655, %v638
    %v657 = vmul.f32 %v656, %v655
    %v658 = vmul.f32 0.5, %v657
    %v659 = vsub.f32 1.5, %v658
    %v660 = vmul.f32 %v655, %v659
    %vm661 = vweird.f32 %v638
    %vm662 = vweird.f32 %v655
    %vm663 = vmor %vm661, %vm662
    %v664 = vsel %vm663, %v655, %v660
    %v665 = vrsqrt.pop %v639
    %v666 = vmul.f32 %v665, %v639
    %v667 = vmul.f32 %v666, %v665
    %v668 = vmul.f32 0.5, %v667
    %v669 = vsub.f32 1.5, %v668
    %v670 = vmul.f32 %v665, %v669
    %vm671 = vweird.f32 %v639
    %vm672 = vweird.f32 %v665
    %vm673 = vmor %vm671, %vm672
    %v674 = vsel %vm673, %v665, %v670
    %v675 = vrsqrt.pop %v640
    %v676 = vmul.f32 %v675, %v640
    %v677 = vmul.f32 %v676, %v675
    %v678 = vmul.f32 0.5, %v677
    %v679 = vsub.f32 1.5, %v678
    %v680 = vmul.f32 %v675, %v679
    %vm681 = vweird.f32 %v640
    %vm682 = vweird.f32 %v675
    %vm683 = vmor %vm681, %vm682
    %v684 = vsel %vm683, %v675, %v680
    %v685 = vrsqrt.pop %v641
    %v686 = vmul.f32 %v685, %v641
    %v687 = vmul.f32 %v686, %v685
    %v688 = vmul.f32 0.5, %v687
    %v689 = vsub.f32 1.5, %v688
    %v690 = vmul.f32 %v685, %v689
    %vm691 = vweird.f32 %v641
    %vm692 = vweird.f32 %v685
    %vm693 = vmor %vm691, %vm692
    %v694 = vsel %vm693, %v685, %v690
    %v695 = vrsqrt.pop %v642
    %v696 = vmul.f32 %v695, %v642
    %v697 = vmul.f32 %v696, %v695
    %v698 = vmul.f32 0.5, %v697
    %v699 = vsub.f32 1.5, %v698
    %v700 = vmul.f32 %v695, %v699
    %vm701 = vweird.f32 %v642
    %vm702 = vweird.f32 %v695
    %vm703 = vmor %vm701, %vm702
    %v704 = vsel %vm703, %v695, %v700
    %v705 = vrsqrt.pop %v643
    %v706 = vmul.f32 %v705, %v643
    %v707 = vmul.f32 %v706, %v705
    %v708 = vmul.f32 0.5, %v707
    %v709 = vsub.f32 1.5, %v708
    %v710 = vmul.f32 %v705, %v709
    %vm711 = vweird.f32 %v643
    %vm712 = vweird.f32 %v705
    %vm713 = vmor %vm711, %vm712
    %v714 = vsel %vm713, %v705, %v710
    %v715 = vrsqrt.pop %v644
    %v716 = vmul.f32 %v715, %v644
    %v717 = vmul.f32 %v716, %v715
    %v718 = vmul.f32 0.5, %v717
    %v719 = vsub.f32 1.5, %v718
    %v720 = vmul.f32 %v715, %v719
    %vm721 = vweird.f32 %v644
    %vm722 = vweird.f32 %v715
    %vm723 = vmor %vm721, %vm722
    %v724 = vsel %vm723, %v715, %v720
    %v725 = vmul.f32 %v12, %v654
    %v726 = vmul.f32 %v13, %v654
    %v727 = vmul.f32 %v14, %v654
    %v728 = vmul.f32 %v15, %v654
    %v729 = vmul.f32 %v16, %v664
    %v730 = vmul.f32 %v17, %v664
    %v731 = vmul.f32 %v18, %v664
    %v732 = vmul.f32 %v19, %v664
    %v733 = vmul.f32 %v20, %v674
    %v734 = vmul.f32 %v21, %v674
    %v735 = vmul.f32 %v22, %v674
    %v736 = vmul.f32 %v23, %v674
    %v737 = vmul.f32 %v24, %v684
    %v738 = vmul.f32 %v25, %v684
    %v739 = vmul.f32 %v26, %v684
    %v740 = vmul.f32 %v27, %v684
    %v741 = vmul.f32 %v28, %v694
    %v742 = vmul.f32 %v29, %v694
    %v743 = vmul.f32 %v30, %v694
    %v744 = vmul.f32 %v31, %v694
    %v745 = vmul.f32 %v32, %v704
    %v746 = vmul.f32 %v33, %v704
    %v747 = vmul.f32 %v34, %v704
    %v748 = vmul.f32 %v35, %v704
    %v749 = vmul.f32 %v36, %v714
    %v750 = vmul.f32 %v37, %v714
    %v751 = vmul.f32 %v38, %v714
    %v752 = vmul.f32 %v39, %v714
    %v753 = vmul.f32 %v40, %v724
    %v754 = vmul.f32 %v41, %v724
    %v755 = vmul.f32 %v42, %v724
    %v756 = vmul.f32 %v43, %v724
    %v757 = vlaneseq
    %v758 = vshrl.u32 %v757, 7
    %v759 = vmul.f32 %v725, %v725
    %v760 = vmul.f32 %v726, %v726
    %v761 = vmul.f32 %v727, %v727
    %v762 = vmul.f32 %v728, %v728
    %v763 = vmul.f32 %v729, %v725
    %v764 = vmul.f32 %v730, %v726
    %v765 = vmul.f32 %v731, %v727
    %v766 = vmul.f32 %v732, %v728
    %v767 = vmul.f32 %v733, %v725
    %v768 = vmul.f32 %v734, %v726
    %v769 = vmul.f32 %v735, %v727
    %v770 = vmul.f32 %v736, %v728
    %v771 = vmul.f32 %v737, %v725
    %v772 = vmul.f32 %v738, %v726
    %v773 = vmul.f32 %v739, %v727
    %v774 = vmul.f32 %v740, %v728
    %v775 = vmul.f32 %v741, %v725
    %v776 = vmul.f32 %v742, %v726
    %v777 = vmul.f32 %v743, %v727
    %v778 = vmul.f32 %v744, %v728
    %v779 = vmul.f32 %v745, %v725
    %v780 = vmul.f32 %v746, %v726
    %v781 = vmul.f32 %v747, %v727
    %v782 = vmul.f32 %v748, %v728
    %v783 = vmul.f32 %v749, %v725
    %v784 = vmul.f32 %v750, %v726
    %v785 = vmul.f32 %v751, %v727
    %v786 = vmul.f32 %v752, %v728
    %v787 = vmul.f32 %v753, %v725
    %v788 = vmul.f32 %v754, %v726
    %v789 = vmul.f32 %v755, %v727
    %v790 = vmul.f32 %v756, %v728
    %v791 = vsel %vm300, %v759, 0.0
    %v792 = vsel %vm300, %v760, 0.0
    %v793 = vadd.f32 %v791, %v792
    %v794 = vsel %vm300, %v761, 0.0
    %v795 = vadd.f32 %v793, %v794
    %v796 = vsel %vm300, %v762, 0.0
    %v797 = vadd.f32 %v795, %v796
    %v798 = vrot.slane %v797, 4
    %v799 = vadd.f32 %v797, %v798
    %v800 = vrot.slane %v799, 2
    %v801 = vadd.f32 %v799, %v800
    %v802 = vrot.slane %v801, 1
    %v803 = vadd.f32 %v801, %v802
    %v804 = vsel %vm300, %v763, 0.0
    %v805 = vsel %vm300, %v764, 0.0
    %v806 = vadd.f32 %v804, %v805
    %v807 = vsel %vm300, %v765, 0.0
    %v808 = vadd.f32 %v806, %v807
    %v809 = vsel %vm300, %v766, 0.0
    %v810 = vadd.f32 %v808, %v809
    %v811 = vrot.slane %v810, 4
    %v812 = vadd.f32 %v810, %v811
    %v813 = vrot.slane %v812, 2
    %v814 = vadd.f32 %v812, %v813
    %v815 = vrot.slane %v814, 1
    %v816 = vadd.f32 %v814, %v815
    %v817 = vsel %vm300, %v767, 0.0
    %v818 = vsel %vm300, %v768, 0.0
    %v819 = vadd.f32 %v817, %v818
    %v820 = vsel %vm300, %v769, 0.0
    %v821 = vadd.f32 %v819, %v820
    %v822 = vsel %vm300, %v770, 0.0
    %v823 = vadd.f32 %v821, %v822
    %v824 = vrot.slane %v823, 4
    %v825 = vadd.f32 %v823, %v824
    %v826 = vrot.slane %v825, 2
    %v827 = vadd.f32 %v825, %v826
    %v828 = vrot.slane %v827, 1
    %v829 = vadd.f32 %v827, %v828
    %v830 = vsel %vm300, %v771, 0.0
    %v831 = vsel %vm300, %v772, 0.0
    %v832 = vadd.f32 %v830, %v831
    %v833 = vsel %vm300, %v773, 0.0
    %v834 = vadd.f32 %v832, %v833
    %v835 = vsel %vm300, %v774, 0.0
    %v836 = vadd.f32 %v834, %v835
    %v837 = vrot.slane %v836, 4
    %v838 = vadd.f32 %v836, %v837
    %v839 = vrot.slane %v838, 2
    %v840 = vadd.f32 %v838, %v839
    %v841 = vrot.slane %v840, 1
    %v842 = vadd.f32 %v840, %v841
    %v843 = vsel %vm300, %v775, 0.0
    %v844 = vsel %vm300, %v776, 0.0
    %v845 = vadd.f32 %v843, %v844
    %v846 = vsel %vm300, %v777, 0.0
    %v847 = vadd.f32 %v845, %v846
    %v848 = vsel %vm300, %v778, 0.0
    %v849 = vadd.f32 %v847, %v848
    %v850 = vrot.slane %v849, 4
    %v851 = vadd.f32 %v849, %v850
    %v852 = vrot.slane %v851, 2
    %v853 = vadd.f32 %v851, %v852
    %v854 = vrot.slane %v853, 1
    %v855 = vadd.f32 %v853, %v854
    %v856 = vsel %vm300, %v779, 0.0
    %v857 = vsel %vm300, %v780, 0.0
    %v858 = vadd.f32 %v856, %v857
    %v859 = vsel %vm300, %v781, 0.0
    %v860 = vadd.f32 %v858, %v859
    %v861 = vsel %vm300, %v782, 0.0
    %v862 = vadd.f32 %v860, %v861
    %v863 = vrot.slane %v862, 4
    %v864 = vadd.f32 %v862, %v863
    %v865 = vrot.slane %v864, 2
    %v866 = vadd.f32 %v864, %v865
    %v867 = vrot.slane %v866, 1
    %v868 = vadd.f32 %v866, %v867
    %v869 = vsel %vm300, %v783, 0.0
    %v870 = vsel %vm300, %v784, 0.0
    %v871 = vadd.f32 %v869, %v870
    %v872 = vsel %vm300, %v785, 0.0
    %v873 = vadd.f32 %v871, %v872
    %v874 = vsel %vm300, %v786, 0.0
    %v875 = vadd.f32 %v873, %v874
    %v876 = vrot.slane %v875, 4
    %v877 = vadd.f32 %v875, %v876
    %v878 = vrot.slane %v877, 2
    %v879 = vadd.f32 %v877, %v878
    %v880 = vrot.slane %v879, 1
    %v881 = vadd.f32 %v879, %v880
    %v882 = vsel %vm300, %v787, 0.0
    %v883 = vsel %vm300, %v788, 0.0
    %v884 = vadd.f32 %v882, %v883
    %v885 = vsel %vm300, %v789, 0.0
    %v886 = vadd.f32 %v884, %v885
    %v887 = vsel %vm300, %v790, 0.0
    %v888 = vadd.f32 %v886, %v887
    %v889 = vrot.slane %v888, 4
    %v890 = vadd.f32 %v888, %v889
    %v891 = vrot.slane %v890, 2
    %v892 = vadd.f32 %v890, %v891
    %v893 = vrot.slane %v892, 1
    %v894 = vadd.f32 %v892, %v893
    %vm895 = vcmp.eq.s32.totalorder %v758, 0
    %v896 = vmul.f32 %v803, 1.442695
    %v897 = vpow.pop %v896
    %v898 = vmul.f32 %v816, 1.442695
    %v899 = vpow.pop %v898
    %v900 = vmul.f32 %v829, 1.442695
    %v901 = vpow.pop %v900
    %v902 = vmul.f32 %v842, 1.442695
    %v903 = vpow.pop %v902
    %v904 = vmul.f32 %v855, 1.442695
    %v905 = vpow.pop %v904
    %v906 = vmul.f32 %v868, 1.442695
    %v907 = vpow.pop %v906
    %v908 = vmul.f32 %v881, 1.442695
    %v909 = vpow.pop %v908
    %v910 = vmul.f32 %v894, 1.442695
    %v911 = vpow.pop %v910
    %vm920 = vcmask 1041409
    %v921 = vsel %vm920, %v899, %v897
    %vm922 = vcmask 1042434
    %v923 = vsel %vm922, %v901, %v921
    %vm924 = vcmask 1043459
    %v925 = vsel %vm924, %v903, %v923
    %vm926 = vcmask 1044484
    %v927 = vsel %vm926, %v905, %v925
    %vm928 = vcmask 1045509
    %v929 = vsel %vm928, %v907, %v927
    %vm930 = vcmask 1046534
    %v931 = vsel %vm930, %v909, %v929
    %vm932 = vcmask 1047559
    %v933 = vsel %vm932, %v911, %v931
    %v935 = vsel %vm895, 0.0, %v933
    %v936 = vadd.f32 %v935, 0.0
    %v937 = vmul.f32 %v729, %v729
    %v938 = vmul.f32 %v730, %v730
    %v939 = vmul.f32 %v731, %v731
    %v940 = vmul.f32 %v732, %v732
    %v941 = vmul.f32 %v733, %v729
    %v942 = vmul.f32 %v734, %v730
    %v943 = vmul.f32 %v735, %v731
    %v944 = vmul.f32 %v736, %v732
    %v945 = vmul.f32 %v737, %v729
    %v946 = vmul.f32 %v738, %v730
    %v947 = vmul.f32 %v739, %v731
    %v948 = vmul.f32 %v740, %v732
    %v949 = vmul.f32 %v741, %v729
    %v950 = vmul.f32 %v742, %v730
    %v951 = vmul.f32 %v743, %v731
    %v952 = vmul.f32 %v744, %v732
    %v953 = vmul.f32 %v745, %v729
    %v954 = vmul.f32 %v746, %v730
    %v955 = vmul.f32 %v747, %v731
    %v956 = vmul.f32 %v748, %v732
    %v957 = vmul.f32 %v749, %v729
    %v958 = vmul.f32 %v750, %v730
    %v959 = vmul.f32 %v751, %v731
    %v960 = vmul.f32 %v752, %v732
    %v961 = vmul.f32 %v753, %v729
    %v962 = vmul.f32 %v754, %v730
    %v963 = vmul.f32 %v755, %v731
    %v964 = vmul.f32 %v756, %v732
    %v965 = vsel %vm300, %v937, 0.0
    %v966 = vsel %vm300, %v938, 0.0
    %v967 = vadd.f32 %v965, %v966
    %v968 = vsel %vm300, %v939, 0.0
    %v969 = vadd.f32 %v967, %v968
    %v970 = vsel %vm300, %v940, 0.0
    %v971 = vadd.f32 %v969, %v970
    %v972 = vrot.slane %v971, 4
    %v973 = vadd.f32 %v971, %v972
    %v974 = vrot.slane %v973, 2
    %v975 = vadd.f32 %v973, %v974
    %v976 = vrot.slane %v975, 1
    %v977 = vadd.f32 %v975, %v976
    %v978 = vsel %vm300, %v941, 0.0
    %v979 = vsel %vm300, %v942, 0.0
    %v980 = vadd.f32 %v978, %v979
    %v981 = vsel %vm300, %v943, 0.0
    %v982 = vadd.f32 %v980, %v981
    %v983 = vsel %vm300, %v944, 0.0
    %v984 = vadd.f32 %v982, %v983
    %v985 = vrot.slane %v984, 4
    %v986 = vadd.f32 %v984, %v985
    %v987 = vrot.slane %v986, 2
    %v988 = vadd.f32 %v986, %v987
    %v989 = vrot.slane %v988, 1
    %v990 = vadd.f32 %v988, %v989
    %v991 = vsel %vm300, %v945, 0.0
    %v992 = vsel %vm300, %v946, 0.0
    %v993 = vadd.f32 %v991, %v992
    %v994 = vsel %vm300, %v947, 0.0
    %v995 = vadd.f32 %v993, %v994
    %v996 = vsel %vm300, %v948, 0.0
    %v997 = vadd.f32 %v995, %v996
    %v998 = vrot.slane %v997, 4
    %v999 = vadd.f32 %v997, %v998
    %v1000 = vrot.slane %v999, 2
    %v1001 = vadd.f32 %v999, %v1000
    %v1002 = vrot.slane %v1001, 1
    %v1003 = vadd.f32 %v1001, %v1002
    %v1004 = vsel %vm300, %v949, 0.0
    %v1005 = vsel %vm300, %v950, 0.0
    %v1006 = vadd.f32 %v1004, %v1005
    %v1007 = vsel %vm300, %v951, 0.0
    %v1008 = vadd.f32 %v1006, %v1007
    %v1009 = vsel %vm300, %v952, 0.0
    %v1010 = vadd.f32 %v1008, %v1009
    %v1011 = vrot.slane %v1010, 4
    %v1012 = vadd.f32 %v1010, %v1011
    %v1013 = vrot.slane %v1012, 2
    %v1014 = vadd.f32 %v1012, %v1013
    %v1015 = vrot.slane %v1014, 1
    %v1016 = vadd.f32 %v1014, %v1015
    %v1017 = vsel %vm300, %v953, 0.0
    %v1018 = vsel %vm300, %v954, 0.0
    %v1019 = vadd.f32 %v1017, %v1018
    %v1020 = vsel %vm300, %v955, 0.0
    %v1021 = vadd.f32 %v1019, %v1020
    %v1022 = vsel %vm300, %v956, 0.0
    %v1023 = vadd.f32 %v1021, %v1022
    %v1024 = vrot.slane %v1023, 4
    %v1025 = vadd.f32 %v1023, %v1024
    %v1026 = vrot.slane %v1025, 2
    %v1027 = vadd.f32 %v1025, %v1026
    %v1028 = vrot.slane %v1027, 1
    %v1029 = vadd.f32 %v1027, %v1028
    %v1030 = vsel %vm300, %v957, 0.0
    %v1031 = vsel %vm300, %v958, 0.0
    %v1032 = vadd.f32 %v1030, %v1031
    %v1033 = vsel %vm300, %v959, 0.0
    %v1034 = vadd.f32 %v1032, %v1033
    %v1035 = vsel %vm300, %v960, 0.0
    %v1036 = vadd.f32 %v1034, %v1035
    %v1037 = vrot.slane %v1036, 4
    %v1038 = vadd.f32 %v1036, %v1037
    %v1039 = vrot.slane %v1038, 2
    %v1040 = vadd.f32 %v1038, %v1039
    %v1041 = vrot.slane %v1040, 1
    %v1042 = vadd.f32 %v1040, %v1041
    %v1043 = vsel %vm300, %v961, 0.0
    %v1044 = vsel %vm300, %v962, 0.0
    %v1045 = vadd.f32 %v1043, %v1044
    %v1046 = vsel %vm300, %v963, 0.0
    %v1047 = vadd.f32 %v1045, %v1046
    %v1048 = vsel %vm300, %v964, 0.0
    %v1049 = vadd.f32 %v1047, %v1048
    %v1050 = vrot.slane %v1049, 4
    %v1051 = vadd.f32 %v1049, %v1050
    %v1052 = vrot.slane %v1051, 2
    %v1053 = vadd.f32 %v1051, %v1052
    %v1054 = vrot.slane %v1053, 1
    %v1055 = vadd.f32 %v1053, %v1054
    %vm1056 = vcmp.eq.s32.totalorder %v758, 1
    %v1057 = vmul.f32 %v977, 1.442695
    %v1058 = vpow.pop %v1057
    %v1059 = vmul.f32 %v990, 1.442695
    %v1060 = vpow.pop %v1059
    %v1061 = vmul.f32 %v1003, 1.442695
    %v1062 = vpow.pop %v1061
    %v1063 = vmul.f32 %v1016, 1.442695
    %v1064 = vpow.pop %v1063
    %v1065 = vmul.f32 %v1029, 1.442695
    %v1066 = vpow.pop %v1065
    %v1067 = vmul.f32 %v1042, 1.442695
    %v1068 = vpow.pop %v1067
    %v1069 = vmul.f32 %v1055, 1.442695
    %v1070 = vpow.pop %v1069
    %v1078 = vsel %vm920, %v1058, %v899
    %v1079 = vsel %vm922, %v1060, %v1078
    %v1080 = vsel %vm924, %v1062, %v1079
    %v1081 = vsel %vm926, %v1064, %v1080
    %v1082 = vsel %vm928, %v1066, %v1081
    %v1083 = vsel %vm930, %v1068, %v1082
    %v1084 = vsel %vm932, %v1070, %v1083
    %v1086 = vsel %vm1056, 0.0, %v1084
    %v1087 = vadd.f32 %v936, %v1086
    %v1088 = vmul.f32 %v733, %v733
    %v1089 = vmul.f32 %v734, %v734
    %v1090 = vmul.f32 %v735, %v735
    %v1091 = vmul.f32 %v736, %v736
    %v1092 = vmul.f32 %v737, %v733
    %v1093 = vmul.f32 %v738, %v734
    %v1094 = vmul.f32 %v739, %v735
    %v1095 = vmul.f32 %v740, %v736
    %v1096 = vmul.f32 %v741, %v733
    %v1097 = vmul.f32 %v742, %v734
    %v1098 = vmul.f32 %v743, %v735
    %v1099 = vmul.f32 %v744, %v736
    %v1100 = vmul.f32 %v745, %v733
    %v1101 = vmul.f32 %v746, %v734
    %v1102 = vmul.f32 %v747, %v735
    %v1103 = vmul.f32 %v748, %v736
    %v1104 = vmul.f32 %v749, %v733
    %v1105 = vmul.f32 %v750, %v734
    %v1106 = vmul.f32 %v751, %v735
    %v1107 = vmul.f32 %v752, %v736
    %v1108 = vmul.f32 %v753, %v733
    %v1109 = vmul.f32 %v754, %v734
    %v1110 = vmul.f32 %v755, %v735
    %v1111 = vmul.f32 %v756, %v736
    %v1112 = vsel %vm300, %v1088, 0.0
    %v1113 = vsel %vm300, %v1089, 0.0
    %v1114 = vadd.f32 %v1112, %v1113
    %v1115 = vsel %vm300, %v1090, 0.0
    %v1116 = vadd.f32 %v1114, %v1115
    %v1117 = vsel %vm300, %v1091, 0.0
    %v1118 = vadd.f32 %v1116, %v1117
    %v1119 = vrot.slane %v1118, 4
    %v1120 = vadd.f32 %v1118, %v1119
    %v1121 = vrot.slane %v1120, 2
    %v1122 = vadd.f32 %v1120, %v1121
    %v1123 = vrot.slane %v1122, 1
    %v1124 = vadd.f32 %v1122, %v1123
    %v1125 = vsel %vm300, %v1092, 0.0
    %v1126 = vsel %vm300, %v1093, 0.0
    %v1127 = vadd.f32 %v1125, %v1126
    %v1128 = vsel %vm300, %v1094, 0.0
    %v1129 = vadd.f32 %v1127, %v1128
    %v1130 = vsel %vm300, %v1095, 0.0
    %v1131 = vadd.f32 %v1129, %v1130
    %v1132 = vrot.slane %v1131, 4
    %v1133 = vadd.f32 %v1131, %v1132
    %v1134 = vrot.slane %v1133, 2
    %v1135 = vadd.f32 %v1133, %v1134
    %v1136 = vrot.slane %v1135, 1
    %v1137 = vadd.f32 %v1135, %v1136
    %v1138 = vsel %vm300, %v1096, 0.0
    %v1139 = vsel %vm300, %v1097, 0.0
    %v1140 = vadd.f32 %v1138, %v1139
    %v1141 = vsel %vm300, %v1098, 0.0
    %v1142 = vadd.f32 %v1140, %v1141
    %v1143 = vsel %vm300, %v1099, 0.0
    %v1144 = vadd.f32 %v1142, %v1143
    %v1145 = vrot.slane %v1144, 4
    %v1146 = vadd.f32 %v1144, %v1145
    %v1147 = vrot.slane %v1146, 2
    %v1148 = vadd.f32 %v1146, %v1147
    %v1149 = vrot.slane %v1148, 1
    %v1150 = vadd.f32 %v1148, %v1149
    %v1151 = vsel %vm300, %v1100, 0.0
    %v1152 = vsel %vm300, %v1101, 0.0
    %v1153 = vadd.f32 %v1151, %v1152
    %v1154 = vsel %vm300, %v1102, 0.0
    %v1155 = vadd.f32 %v1153, %v1154
    %v1156 = vsel %vm300, %v1103, 0.0
    %v1157 = vadd.f32 %v1155, %v1156
    %v1158 = vrot.slane %v1157, 4
    %v1159 = vadd.f32 %v1157, %v1158
    %v1160 = vrot.slane %v1159, 2
    %v1161 = vadd.f32 %v1159, %v1160
    %v1162 = vrot.slane %v1161, 1
    %v1163 = vadd.f32 %v1161, %v1162
    %v1164 = vsel %vm300, %v1104, 0.0
    %v1165 = vsel %vm300, %v1105, 0.0
    %v1166 = vadd.f32 %v1164, %v1165
    %v1167 = vsel %vm300, %v1106, 0.0
    %v1168 = vadd.f32 %v1166, %v1167
    %v1169 = vsel %vm300, %v1107, 0.0
    %v1170 = vadd.f32 %v1168, %v1169
    %v1171 = vrot.slane %v1170, 4
    %v1172 = vadd.f32 %v1170, %v1171
    %v1173 = vrot.slane %v1172, 2
    %v1174 = vadd.f32 %v1172, %v1173
    %v1175 = vrot.slane %v1174, 1
    %v1176 = vadd.f32 %v1174, %v1175
    %v1177 = vsel %vm300, %v1108, 0.0
    %v1178 = vsel %vm300, %v1109, 0.0
    %v1179 = vadd.f32 %v1177, %v1178
    %v1180 = vsel %vm300, %v1110, 0.0
    %v1181 = vadd.f32 %v1179, %v1180
    %v1182 = vsel %vm300, %v1111, 0.0
    %v1183 = vadd.f32 %v1181, %v1182
    %v1184 = vrot.slane %v1183, 4
    %v1185 = vadd.f32 %v1183, %v1184
    %v1186 = vrot.slane %v1185, 2
    %v1187 = vadd.f32 %v1185, %v1186
    %v1188 = vrot.slane %v1187, 1
    %v1189 = vadd.f32 %v1187, %v1188
    %vm1190 = vcmp.eq.s32.totalorder %v758, 2
    %v1191 = vmul.f32 %v1124, 1.442695
    %v1192 = vpow.pop %v1191
    %v1193 = vmul.f32 %v1137, 1.442695
    %v1194 = vpow.pop %v1193
    %v1195 = vmul.f32 %v1150, 1.442695
    %v1196 = vpow.pop %v1195
    %v1197 = vmul.f32 %v1163, 1.442695
    %v1198 = vpow.pop %v1197
    %v1199 = vmul.f32 %v1176, 1.442695
    %v1200 = vpow.pop %v1199
    %v1201 = vmul.f32 %v1189, 1.442695
    %v1202 = vpow.pop %v1201
    %v1209 = vsel %vm920, %v1060, %v901
    %v1210 = vsel %vm922, %v1192, %v1209
    %v1211 = vsel %vm924, %v1194, %v1210
    %v1212 = vsel %vm926, %v1196, %v1211
    %v1213 = vsel %vm928, %v1198, %v1212
    %v1214 = vsel %vm930, %v1200, %v1213
    %v1215 = vsel %vm932, %v1202, %v1214
    %v1217 = vsel %vm1190, 0.0, %v1215
    %v1218 = vadd.f32 %v1087, %v1217
    %v1219 = vmul.f32 %v737, %v737
    %v1220 = vmul.f32 %v738, %v738
    %v1221 = vmul.f32 %v739, %v739
    %v1222 = vmul.f32 %v740, %v740
    %v1223 = vmul.f32 %v741, %v737
    %v1224 = vmul.f32 %v742, %v738
    %v1225 = vmul.f32 %v743, %v739
    %v1226 = vmul.f32 %v744, %v740
    %v1227 = vmul.f32 %v745, %v737
    %v1228 = vmul.f32 %v746, %v738
    %v1229 = vmul.f32 %v747, %v739
    %v1230 = vmul.f32 %v748, %v740
    %v1231 = vmul.f32 %v749, %v737
    %v1232 = vmul.f32 %v750, %v738
    %v1233 = vmul.f32 %v751, %v739
    %v1234 = vmul.f32 %v752, %v740
    %v1235 = vmul.f32 %v753, %v737
    %v1236 = vmul.f32 %v754, %v738
    %v1237 = vmul.f32 %v755, %v739
    %v1238 = vmul.f32 %v756, %v740
    %v1239 = vsel %vm300, %v1219, 0.0
    %v1240 = vsel %vm300, %v1220, 0.0
    %v1241 = vadd.f32 %v1239, %v1240
    %v1242 = vsel %vm300, %v1221, 0.0
    %v1243 = vadd.f32 %v1241, %v1242
    %v1244 = vsel %vm300, %v1222, 0.0
    %v1245 = vadd.f32 %v1243, %v1244
    %v1246 = vrot.slane %v1245, 4
    %v1247 = vadd.f32 %v1245, %v1246
    %v1248 = vrot.slane %v1247, 2
    %v1249 = vadd.f32 %v1247, %v1248
    %v1250 = vrot.slane %v1249, 1
    %v1251 = vadd.f32 %v1249, %v1250
    %v1252 = vsel %vm300, %v1223, 0.0
    %v1253 = vsel %vm300, %v1224, 0.0
    %v1254 = vadd.f32 %v1252, %v1253
    %v1255 = vsel %vm300, %v1225, 0.0
    %v1256 = vadd.f32 %v1254, %v1255
    %v1257 = vsel %vm300, %v1226, 0.0
    %v1258 = vadd.f32 %v1256, %v1257
    %v1259 = vrot.slane %v1258, 4
    %v1260 = vadd.f32 %v1258, %v1259
    %v1261 = vrot.slane %v1260, 2
    %v1262 = vadd.f32 %v1260, %v1261
    %v1263 = vrot.slane %v1262, 1
    %v1264 = vadd.f32 %v1262, %v1263
    %v1265 = vsel %vm300, %v1227, 0.0
    %v1266 = vsel %vm300, %v1228, 0.0
    %v1267 = vadd.f32 %v1265, %v1266
    %v1268 = vsel %vm300, %v1229, 0.0
    %v1269 = vadd.f32 %v1267, %v1268
    %v1270 = vsel %vm300, %v1230, 0.0
    %v1271 = vadd.f32 %v1269, %v1270
    %v1272 = vrot.slane %v1271, 4
    %v1273 = vadd.f32 %v1271, %v1272
    %v1274 = vrot.slane %v1273, 2
    %v1275 = vadd.f32 %v1273, %v1274
    %v1276 = vrot.slane %v1275, 1
    %v1277 = vadd.f32 %v1275, %v1276
    %v1278 = vsel %vm300, %v1231, 0.0
    %v1279 = vsel %vm300, %v1232, 0.0
    %v1280 = vadd.f32 %v1278, %v1279
    %v1281 = vsel %vm300, %v1233, 0.0
    %v1282 = vadd.f32 %v1280, %v1281
    %v1283 = vsel %vm300, %v1234, 0.0
    %v1284 = vadd.f32 %v1282, %v1283
    %v1285 = vrot.slane %v1284, 4
    %v1286 = vadd.f32 %v1284, %v1285
    %v1287 = vrot.slane %v1286, 2
    %v1288 = vadd.f32 %v1286, %v1287
    %v1289 = vrot.slane %v1288, 1
    %v1290 = vadd.f32 %v1288, %v1289
    %v1291 = vsel %vm300, %v1235, 0.0
    %v1292 = vsel %vm300, %v1236, 0.0
    %v1293 = vadd.f32 %v1291, %v1292
    %v1294 = vsel %vm300, %v1237, 0.0
    %v1295 = vadd.f32 %v1293, %v1294
    %v1296 = vsel %vm300, %v1238, 0.0
    %v1297 = vadd.f32 %v1295, %v1296
    %v1298 = vrot.slane %v1297, 4
    %v1299 = vadd.f32 %v1297, %v1298
    %v1300 = vrot.slane %v1299, 2
    %v1301 = vadd.f32 %v1299, %v1300
    %v1302 = vrot.slane %v1301, 1
    %v1303 = vadd.f32 %v1301, %v1302
    %vm1304 = vcmp.eq.s32.totalorder %v758, 3
    %v1305 = vmul.f32 %v1251, 1.442695
    %v1306 = vpow.pop %v1305
    %v1307 = vmul.f32 %v1264, 1.442695
    %v1308 = vpow.pop %v1307
    %v1309 = vmul.f32 %v1277, 1.442695
    %v1310 = vpow.pop %v1309
    %v1311 = vmul.f32 %v1290, 1.442695
    %v1312 = vpow.pop %v1311
    %v1313 = vmul.f32 %v1303, 1.442695
    %v1314 = vpow.pop %v1313
    %v1320 = vsel %vm920, %v1062, %v903
    %v1321 = vsel %vm922, %v1194, %v1320
    %v1322 = vsel %vm924, %v1306, %v1321
    %v1323 = vsel %vm926, %v1308, %v1322
    %v1324 = vsel %vm928, %v1310, %v1323
    %v1325 = vsel %vm930, %v1312, %v1324
    %v1326 = vsel %vm932, %v1314, %v1325
    %v1328 = vsel %vm1304, 0.0, %v1326
    %v1329 = vadd.f32 %v1218, %v1328
    %v1330 = vmul.f32 %v741, %v741
    %v1331 = vmul.f32 %v742, %v742
    %v1332 = vmul.f32 %v743, %v743
    %v1333 = vmul.f32 %v744, %v744
    %v1334 = vmul.f32 %v745, %v741
    %v1335 = vmul.f32 %v746, %v742
    %v1336 = vmul.f32 %v747, %v743
    %v1337 = vmul.f32 %v748, %v744
    %v1338 = vmul.f32 %v749, %v741
    %v1339 = vmul.f32 %v750, %v742
    %v1340 = vmul.f32 %v751, %v743
    %v1341 = vmul.f32 %v752, %v744
    %v1342 = vmul.f32 %v753, %v741
    %v1343 = vmul.f32 %v754, %v742
    %v1344 = vmul.f32 %v755, %v743
    %v1345 = vmul.f32 %v756, %v744
    %v1346 = vsel %vm300, %v1330, 0.0
    %v1347 = vsel %vm300, %v1331, 0.0
    %v1348 = vadd.f32 %v1346, %v1347
    %v1349 = vsel %vm300, %v1332, 0.0
    %v1350 = vadd.f32 %v1348, %v1349
    %v1351 = vsel %vm300, %v1333, 0.0
    %v1352 = vadd.f32 %v1350, %v1351
    %v1353 = vrot.slane %v1352, 4
    %v1354 = vadd.f32 %v1352, %v1353
    %v1355 = vrot.slane %v1354, 2
    %v1356 = vadd.f32 %v1354, %v1355
    %v1357 = vrot.slane %v1356, 1
    %v1358 = vadd.f32 %v1356, %v1357
    %v1359 = vsel %vm300, %v1334, 0.0
    %v1360 = vsel %vm300, %v1335, 0.0
    %v1361 = vadd.f32 %v1359, %v1360
    %v1362 = vsel %vm300, %v1336, 0.0
    %v1363 = vadd.f32 %v1361, %v1362
    %v1364 = vsel %vm300, %v1337, 0.0
    %v1365 = vadd.f32 %v1363, %v1364
    %v1366 = vrot.slane %v1365, 4
    %v1367 = vadd.f32 %v1365, %v1366
    %v1368 = vrot.slane %v1367, 2
    %v1369 = vadd.f32 %v1367, %v1368
    %v1370 = vrot.slane %v1369, 1
    %v1371 = vadd.f32 %v1369, %v1370
    %v1372 = vsel %vm300, %v1338, 0.0
    %v1373 = vsel %vm300, %v1339, 0.0
    %v1374 = vadd.f32 %v1372, %v1373
    %v1375 = vsel %vm300, %v1340, 0.0
    %v1376 = vadd.f32 %v1374, %v1375
    %v1377 = vsel %vm300, %v1341, 0.0
    %v1378 = vadd.f32 %v1376, %v1377
    %v1379 = vrot.slane %v1378, 4
    %v1380 = vadd.f32 %v1378, %v1379
    %v1381 = vrot.slane %v1380, 2
    %v1382 = vadd.f32 %v1380, %v1381
    %v1383 = vrot.slane %v1382, 1
    %v1384 = vadd.f32 %v1382, %v1383
    %v1385 = vsel %vm300, %v1342, 0.0
    %v1386 = vsel %vm300, %v1343, 0.0
    %v1387 = vadd.f32 %v1385, %v1386
    %v1388 = vsel %vm300, %v1344, 0.0
    %v1389 = vadd.f32 %v1387, %v1388
    %v1390 = vsel %vm300, %v1345, 0.0
    %v1391 = vadd.f32 %v1389, %v1390
    %v1392 = vrot.slane %v1391, 4
    %v1393 = vadd.f32 %v1391, %v1392
    %v1394 = vrot.slane %v1393, 2
    %v1395 = vadd.f32 %v1393, %v1394
    %v1396 = vrot.slane %v1395, 1
    %v1397 = vadd.f32 %v1395, %v1396
    %vm1398 = vcmp.eq.s32.totalorder %v758, 4
    %v1399 = vmul.f32 %v1358, 1.442695
    %v1400 = vpow.pop %v1399
    %v1401 = vmul.f32 %v1371, 1.442695
    %v1402 = vpow.pop %v1401
    %v1403 = vmul.f32 %v1384, 1.442695
    %v1404 = vpow.pop %v1403
    %v1405 = vmul.f32 %v1397, 1.442695
    %v1406 = vpow.pop %v1405
    %v1411 = vsel %vm920, %v1064, %v905
    %v1412 = vsel %vm922, %v1196, %v1411
    %v1413 = vsel %vm924, %v1308, %v1412
    %v1414 = vsel %vm926, %v1400, %v1413
    %v1415 = vsel %vm928, %v1402, %v1414
    %v1416 = vsel %vm930, %v1404, %v1415
    %v1417 = vsel %vm932, %v1406, %v1416
    %v1419 = vsel %vm1398, 0.0, %v1417
    %v1420 = vadd.f32 %v1329, %v1419
    %v1421 = vmul.f32 %v745, %v745
    %v1422 = vmul.f32 %v746, %v746
    %v1423 = vmul.f32 %v747, %v747
    %v1424 = vmul.f32 %v748, %v748
    %v1425 = vmul.f32 %v749, %v745
    %v1426 = vmul.f32 %v750, %v746
    %v1427 = vmul.f32 %v751, %v747
    %v1428 = vmul.f32 %v752, %v748
    %v1429 = vmul.f32 %v753, %v745
    %v1430 = vmul.f32 %v754, %v746
    %v1431 = vmul.f32 %v755, %v747
    %v1432 = vmul.f32 %v756, %v748
    %v1433 = vsel %vm300, %v1421, 0.0
    %v1434 = vsel %vm300, %v1422, 0.0
    %v1435 = vadd.f32 %v1433, %v1434
    %v1436 = vsel %vm300, %v1423, 0.0
    %v1437 = vadd.f32 %v1435, %v1436
    %v1438 = vsel %vm300, %v1424, 0.0
    %v1439 = vadd.f32 %v1437, %v1438
    %v1440 = vrot.slane %v1439, 4
    %v1441 = vadd.f32 %v1439, %v1440
    %v1442 = vrot.slane %v1441, 2
    %v1443 = vadd.f32 %v1441, %v1442
    %v1444 = vrot.slane %v1443, 1
    %v1445 = vadd.f32 %v1443, %v1444
    %v1446 = vsel %vm300, %v1425, 0.0
    %v1447 = vsel %vm300, %v1426, 0.0
    %v1448 = vadd.f32 %v1446, %v1447
    %v1449 = vsel %vm300, %v1427, 0.0
    %v1450 = vadd.f32 %v1448, %v1449
    %v1451 = vsel %vm300, %v1428, 0.0
    %v1452 = vadd.f32 %v1450, %v1451
    %v1453 = vrot.slane %v1452, 4
    %v1454 = vadd.f32 %v1452, %v1453
    %v1455 = vrot.slane %v1454, 2
    %v1456 = vadd.f32 %v1454, %v1455
    %v1457 = vrot.slane %v1456, 1
    %v1458 = vadd.f32 %v1456, %v1457
    %v1459 = vsel %vm300, %v1429, 0.0
    %v1460 = vsel %vm300, %v1430, 0.0
    %v1461 = vadd.f32 %v1459, %v1460
    %v1462 = vsel %vm300, %v1431, 0.0
    %v1463 = vadd.f32 %v1461, %v1462
    %v1464 = vsel %vm300, %v1432, 0.0
    %v1465 = vadd.f32 %v1463, %v1464
    %v1466 = vrot.slane %v1465, 4
    %v1467 = vadd.f32 %v1465, %v1466
    %v1468 = vrot.slane %v1467, 2
    %v1469 = vadd.f32 %v1467, %v1468
    %v1470 = vrot.slane %v1469, 1
    %v1471 = vadd.f32 %v1469, %v1470
    %vm1472 = vcmp.eq.s32.totalorder %v758, 5
    %v1473 = vmul.f32 %v1445, 1.442695
    %v1474 = vpow.pop %v1473
    %v1475 = vmul.f32 %v1458, 1.442695
    %v1476 = vpow.pop %v1475
    %v1477 = vmul.f32 %v1471, 1.442695
    %v1478 = vpow.pop %v1477
    %v1482 = vsel %vm920, %v1066, %v907
    %v1483 = vsel %vm922, %v1198, %v1482
    %v1484 = vsel %vm924, %v1310, %v1483
    %v1485 = vsel %vm926, %v1402, %v1484
    %v1486 = vsel %vm928, %v1474, %v1485
    %v1487 = vsel %vm930, %v1476, %v1486
    %v1488 = vsel %vm932, %v1478, %v1487
    %v1490 = vsel %vm1472, 0.0, %v1488
    %v1491 = vadd.f32 %v1420, %v1490
    %v1492 = vmul.f32 %v749, %v749
    %v1493 = vmul.f32 %v750, %v750
    %v1494 = vmul.f32 %v751, %v751
    %v1495 = vmul.f32 %v752, %v752
    %v1496 = vmul.f32 %v753, %v749
    %v1497 = vmul.f32 %v754, %v750
    %v1498 = vmul.f32 %v755, %v751
    %v1499 = vmul.f32 %v756, %v752
    %v1500 = vsel %vm300, %v1492, 0.0
    %v1501 = vsel %vm300, %v1493, 0.0
    %v1502 = vadd.f32 %v1500, %v1501
    %v1503 = vsel %vm300, %v1494, 0.0
    %v1504 = vadd.f32 %v1502, %v1503
    %v1505 = vsel %vm300, %v1495, 0.0
    %v1506 = vadd.f32 %v1504, %v1505
    %v1507 = vrot.slane %v1506, 4
    %v1508 = vadd.f32 %v1506, %v1507
    %v1509 = vrot.slane %v1508, 2
    %v1510 = vadd.f32 %v1508, %v1509
    %v1511 = vrot.slane %v1510, 1
    %v1512 = vadd.f32 %v1510, %v1511
    %v1513 = vsel %vm300, %v1496, 0.0
    %v1514 = vsel %vm300, %v1497, 0.0
    %v1515 = vadd.f32 %v1513, %v1514
    %v1516 = vsel %vm300, %v1498, 0.0
    %v1517 = vadd.f32 %v1515, %v1516
    %v1518 = vsel %vm300, %v1499, 0.0
    %v1519 = vadd.f32 %v1517, %v1518
    %v1520 = vrot.slane %v1519, 4
    %v1521 = vadd.f32 %v1519, %v1520
    %v1522 = vrot.slane %v1521, 2
    %v1523 = vadd.f32 %v1521, %v1522
    %v1524 = vrot.slane %v1523, 1
    %v1525 = vadd.f32 %v1523, %v1524
    %vm1526 = vcmp.eq.s32.totalorder %v758, 6
    %v1527 = vmul.f32 %v1512, 1.442695
    %v1528 = vpow.pop %v1527
    %v1529 = vmul.f32 %v1525, 1.442695
    %v1530 = vpow.pop %v1529
    %v1533 = vsel %vm920, %v1068, %v909
    %v1534 = vsel %vm922, %v1200, %v1533
    %v1535 = vsel %vm924, %v1312, %v1534
    %v1536 = vsel %vm926, %v1404, %v1535
    %v1537 = vsel %vm928, %v1476, %v1536
    %v1538 = vsel %vm930, %v1528, %v1537
    %v1539 = vsel %vm932, %v1530, %v1538
    %v1541 = vsel %vm1526, 0.0, %v1539
    %v1542 = vadd.f32 %v1491, %v1541
    %v1543 = vmul.f32 %v753, %v753
    %v1544 = vmul.f32 %v754, %v754
    %v1545 = vmul.f32 %v755, %v755
    %v1546 = vmul.f32 %v756, %v756
    %v1547 = vsel %vm300, %v1543, 0.0
    %v1548 = vsel %vm300, %v1544, 0.0
    %v1549 = vadd.f32 %v1547, %v1548
    %v1550 = vsel %vm300, %v1545, 0.0
    %v1551 = vadd.f32 %v1549, %v1550
    %v1552 = vsel %vm300, %v1546, 0.0
    %v1553 = vadd.f32 %v1551, %v1552
    %v1554 = vrot.slane %v1553, 4
    %v1555 = vadd.f32 %v1553, %v1554
    %v1556 = vrot.slane %v1555, 2
    %v1557 = vadd.f32 %v1555, %v1556
    %v1558 = vrot.slane %v1557, 1
    %v1559 = vadd.f32 %v1557, %v1558
    %vm1560 = vcmp.eq.s32.totalorder %v758, 7
    %v1561 = vmul.f32 %v1559, 1.442695
    %v1562 = vpow.pop %v1561
    %v1564 = vsel %vm920, %v1070, %v911
    %v1565 = vsel %vm922, %v1202, %v1564
    %v1566 = vsel %vm924, %v1314, %v1565
    %v1567 = vsel %vm926, %v1406, %v1566
    %v1568 = vsel %vm928, %v1478, %v1567
    %v1569 = vsel %vm930, %v1530, %v1568
    %v1570 = vsel %vm932, %v1562, %v1569
    %v1572 = vsel %vm1560, 0.0, %v1570
    %v1573 = vadd.f32 %v1542, %v1572
    %v1574 = vlog2.pop %v1573
    %v1575 = vmul.f32 %v1574, 0.6931472
    %v1577 = vrot.slane %v1575, 1
    %v1578 = vrot.slane %v1575, 2
    %v1579 = vrot.slane %v1575, 3
    %v1580 = vrot.slane %v1575, 4
    %v1581 = vrot.slane %v1575, 5
    %v1582 = vrot.slane %v1575, 6
    %v1583 = vrot.slane %v1575, 7
    %v1592 = vadd.f32 %v416, %v1575
    %v1593 = vadd.f32 %v428, %v1577
    %v1594 = vadd.f32 %v440, %v1578
    %v1595 = vadd.f32 %v452, %v1579
    %v1596 = vadd.f32 %v464, %v1580
    %v1597 = vadd.f32 %v476, %v1581
    %v1598 = vadd.f32 %v488, %v1582
    %v1599 = vadd.f32 %v500, %v1583
    %v1600 = vsub.f32 %v1592, %v803
    %v1601 = vsub.f32 %v1593, %v816
    %v1602 = vsub.f32 %v1594, %v829
    %v1603 = vsub.f32 %v1595, %v842
    %v1604 = vsub.f32 %v1596, %v855
    %v1605 = vsub.f32 %v1597, %v868
    %v1606 = vsub.f32 %v1598, %v881
    %v1607 = vsub.f32 %v1599, %v894
    %v1616 = vrot.slane %v1601, 7
    %v1617 = vsel %vm920, %v1616, %v1600
    %v1618 = vrot.slane %v1602, 6
    %v1619 = vsel %vm922, %v1618, %v1617
    %v1620 = vrot.slane %v1603, 5
    %v1621 = vsel %vm924, %v1620, %v1619
    %v1622 = vrot.slane %v1604, 4
    %v1623 = vsel %vm926, %v1622, %v1621
    %v1624 = vrot.slane %v1605, 3
    %v1625 = vsel %vm928, %v1624, %v1623
    %v1626 = vrot.slane %v1606, 2
    %v1627 = vsel %vm930, %v1626, %v1625
    %v1628 = vrot.slane %v1607, 1
    %v1629 = vsel %vm932, %v1628, %v1627
    %v1631 = vsel %vm895, 0.0, %v1629
    %v1632 = vsel %vm300, %v1631, 0.0
    %v1633 = vrot.slane %v1632, 4
    %v1634 = vadd.f32 %v1632, %v1633
    %v1635 = vrot.slane %v1634, 2
    %v1636 = vadd.f32 %v1634, %v1635
    %v1637 = vrot.slane %v1636, 1
    %v1638 = vadd.f32 %v1636, %v1637
    %vm1639 = vcmask 57344
    %1640 = vst.msk [vmem:[#allocation2] sm:$0x1] %vm1639, %v1638
    // Predicated region
    $region10: #{tpu_custom_call.1} parent=1 // pred_check
      _
    $region11: #{tpu_custom_call.1} parent=1 // pred_check_branch
      %1642 = sbr.rel (0) target = $region13
    $region12: #{tpu_custom_call.1} parent=1 // pred_region
      %1644 = vsyncadd [#allocation3], 0
      %s1646 = sshll.u32 [#allocation2], 4
      %s1647 = int_to_ptr.vmem [resolvable:$true] %s1646
      %s1648 = sshll.u32 %s2, 4
      %s1649 = int_to_ptr.hbm [resolvable:$true] %s1648
      %1651 = dma.vmem_to_hbm [thread:$0]  %s1647, 16, %s1649, [#allocation3]
    $region13: #{tpu_custom_call.1} parent=1 // pred_fallthru
      _
    // Predicated region
    $region14: #{tpu_custom_call.1} parent=1 // pred_check
      _
    $region15: #{tpu_custom_call.1} parent=1 // pred_check_branch
      %1653 = sbr.rel (0) target = $region17
    $region16: #{tpu_custom_call.1} parent=1 // pred_region
      %1655 = dma.done [#allocation3], 16
    $region17: #{tpu_custom_call.1} parent=1 // pred_fallthru
      _
    %1656 = vsyncpa [#allocation3], 1

</llo_original>
